<compile_context>
chip_gen: v6e
topology: v6e:2x2x1
jax: 0.10.0
libtpu: 0.0.40
codegen_flags: <defaults>
</compile_context>

<pallas_src>
import math
import numpy as np
import jax
import jax.numpy as jnp
from jax import lax
from jax.experimental import pallas as pl
from jax.experimental.pallas import tpu as pltpu

# ---------------- hyper-parameters (mirrors the PyTorch script globals) -------
HIDDEN_DIMS = 16
OUTPUT_DIM = 2
BRANCH = 4          # args.branch
VTH = 1.0
CODING_TIME = 2     # scaled down from 10 for the small example
TIME_STEPS = 16     # scaled down from 100 (== seq here, so masking triggers)


# ------------------------------- Pallas kernel --------------------------------
def _dense_denri_kernel(x_ref, w1_ref, b1_ref, beta_ref, alpha1_ref,
                        w2_ref, b2_ref, alpha2_ref, mem1_init_ref,
                        out_ref, ffs_scratch, spk_scratch):
    seq, bt, out_dim = out_ref.shape
    branch, ipad, hidden = w1_ref.shape

    # ---- stage feed-forward currents for ALL timesteps into VMEM scratch -------
    # One small bf16 MXU matmul per branch (weights are pre-scaled by
    # (1-beta)*(1-alpha1) in the wrapper).  Layout (branch, seq*bt, hidden) keeps
    # the branch index on a leading dim, so the recurrence never needs lane shifts.
    x2 = x_ref[...]                                              # (seq*bt, ipad) bf16, 0/1 exact
    for j in range(branch):                                      # static; runs once, off the serial path
        ffs_scratch[j] = jnp.dot(x2, w1_ref[j],
                                 preferred_element_type=jnp.float32) + b1_ref[j]

    # ---- hoisted gate broadcasts (JAX does not CSE broadcast_in_dim) -----------
    beta_b = jnp.broadcast_to(beta_ref[...], (branch, bt, hidden))
    alpha1_b = jnp.broadcast_to(alpha1_ref[...], (bt, hidden))
    alpha2_b = jnp.broadcast_to(alpha2_ref[...], (bt, out_dim))

    row_hint = bt if bt % 8 == 0 else 1

    # ---- spike_dense_test_denri_wotanh_R recurrence (fori_loop, bounded vregs) -
    def step(t, carry):
        mem1, spk, dcur = carry
        row = pl.multiple_of(t * bt, row_hint)
        ff_t = ffs_scratch[:, pl.ds(row, bt), :]                 # (branch, bt, hidden) VMEM load
        dcur = beta_b * dcur + ff_t
        l_input = dcur[0]
        for j in range(1, branch):                               # static: plain VALU adds, no XLU
            l_input = l_input + dcur[j]
        # R == 1 for this config; VTH == 1.0 so "- VTH*spk" reduces to "- spk".
        # (the (1-beta)*(1-alpha1) fold in the wrapper relies on R==1 and alpha1
        #  being shared across the branches of a neuron)
        mem1 = mem1 * alpha1_b + l_input - spk                   # spk = previous step's spike
        spk = (mem1 > VTH).astype(jnp.float32)                   # act_fun_adp forward
        spk_scratch[pl.ds(row, bt), :] = spk
        return mem1, spk, dcur

    # set_neuron_state(): mem1 ~ U[0,1) (passed in), spike=0, dendritic cur=0, mem2=0
    mem1_0 = mem1_init_ref[...]                                  # (bt, hidden)
    spk_0 = jnp.zeros((bt, hidden), jnp.float32)
    dcur_0 = jnp.zeros((branch, bt, hidden), jnp.float32)
    lax.fori_loop(0, seq, step, (mem1_0, spk_0, dcur_0))

    # ---- readout_integrator_test: one batched matmul + elementwise leak scan ---
    spk_all = spk_scratch[...].astype(jnp.bfloat16)              # 0/1 -> exact in bf16
    d2_all = jnp.dot(spk_all, w2_ref[...],
                     preferred_element_type=jnp.float32) + b2_ref[...]   # (seq*bt, out)

    mem2 = jnp.zeros((bt, out_dim), jnp.float32)
    outs = []
    for t in range(seq):                                         # tiny per-step state (bt, out)
        mem2 = mem2 * alpha2_b + d2_all[t * bt:(t + 1) * bt, :]
        outs.append(mem2)
    out_ref[...] = jnp.stack(outs, axis=0)                       # single batched store


# ------------------------------- wrapper ---------------------------------------
def dense_denri_d2_output(x, params, *, hidden=HIDDEN_DIMS, branch=BRANCH,
                          output_dim=OUTPUT_DIM, b_tile=None):
    """Runs the temporal recurrence in one Pallas invocation.  x: [batch, seq, input_size]."""
    batch, seq, input_size = x.shape
    pad = ((input_size // branch) * branch + branch - input_size) % branch
    ipad = input_size + pad
    assert VTH == 1.0   # kernel drops the "- VTH*spk" multiply

    if b_tile is None:
        b_tile = 8 if (batch % 8 == 0 and batch > 8) else batch
    assert batch % b_tile == 0
    n_bt = batch // b_tile

    # time-major, grouped per batch tile: row (t*b_tile + b_local) within group i.
    x_p = jnp.pad(x.astype(jnp.float32), ((0, 0), (0, 0), (0, pad)))
    x_tm = jnp.transpose(x_p, (1, 0, 2))                                  # (seq, batch, ipad)
    x_grp = (x_tm.reshape(seq, n_bt, b_tile, ipad)
                  .transpose(1, 0, 2, 3)
                  .reshape(n_bt, seq * b_tile, ipad)
                  .astype(jnp.bfloat16))                                  # binary -> exact in bf16

    beta_hj = jax.nn.sigmoid(params["tau_n"])                             # (hidden, branch)
    alpha1 = jax.nn.sigmoid(params["tau_m1"])                             # (hidden,)
    alpha2 = jax.nn.sigmoid(params["tau_m2"])                             # (out,)

    # Fold (1-beta)*(1-alpha1) into W1/b1 (valid because R == 1 and alpha1 is the
    # same for every branch of a neuron) and (1-alpha2) into W2/b2, so the serial
    # loop body is only mul/add/sub/compare.
    scale1 = ((1.0 - beta_hj) * (1.0 - alpha1[:, None])).T                # (branch, hidden)

    w1m = (params["w1"] * params["mask"]).reshape(hidden, branch, ipad)   # [n, j, i]
    w1_bm = jnp.transpose(w1m, (1, 2, 0)) * scale1[:, None, :]            # (branch, ipad, hidden)
    b1_bm = (params["b1"].reshape(hidden, branch).T * scale1).reshape(branch, 1, hidden)
    beta_bm = beta_hj.T.reshape(branch, 1, hidden)                        # (branch, 1, hidden)

    w2s = params["w2"].T * (1.0 - alpha2)[None, :]                        # (hidden, out)
    b2s = (params["b2"] * (1.0 - alpha2))[None, :]                        # (1, out)

    # bf16 weights keep the MXU at full rate on v5e/v6e/v7x; x/spikes are exact.
    # TODO(synk): validate spike trains against an f32-weight reference (bf16 can
    # flip marginal threshold crossings).
    w1_bm = w1_bm.astype(jnp.bfloat16)
    w2s = w2s.astype(jnp.bfloat16)

    flops = (2 * seq * batch * ipad * hidden * branch
             + 2 * seq * batch * hidden * output_dim
             + 10 * seq * batch * hidden * branch)
    bytes_accessed = (x_grp.size * 2 + w1_bm.size * 2 + w2s.size * 2
                      + (b1_bm.size + beta_bm.size + b2s.size + hidden + output_dim
                         + batch * hidden + seq * batch * output_dim) * 4)

    block_bytes = (seq * b_tile * ipad * 2 + seq * b_tile * output_dim * 4
                   + b_tile * hidden * 4
                   + branch * ipad * hidden * 2 + 2 * branch * hidden * 4
                   + hidden * 4 + hidden * output_dim * 2 + 4 * output_dim * 4)
    scratch_bytes = (seq * branch * b_tile * hidden * 4          # staged FF currents
                     + seq * b_tile * hidden * 4)                # spike history
    vmem_limit = int(min(32 * 1024 * 1024,
                         max(4 * 1024 * 1024, 4 * (2 * block_bytes + scratch_bytes))))

    out = pl.pallas_call(
        _dense_denri_kernel,
        out_shape=jax.ShapeDtypeStruct((seq, batch, output_dim), jnp.float32),
        grid=(n_bt,),
        in_specs=[
            pl.BlockSpec((None, seq * b_tile, ipad), lambda i: (i, 0, 0)),     # x (time-major tile)
            pl.BlockSpec((branch, ipad, hidden), lambda i: (0, 0, 0)),         # W1 (pre-scaled)
            pl.BlockSpec((branch, 1, hidden), lambda i: (0, 0, 0)),            # b1 (pre-scaled)
            pl.BlockSpec((branch, 1, hidden), lambda i: (0, 0, 0)),            # beta
            pl.BlockSpec((1, hidden), lambda i: (0, 0)),                       # alpha1
            pl.BlockSpec((hidden, output_dim), lambda i: (0, 0)),              # W2 (pre-scaled)
            pl.BlockSpec((1, output_dim), lambda i: (0, 0)),                   # b2 (pre-scaled)
            pl.BlockSpec((1, output_dim), lambda i: (0, 0)),                   # alpha2
            pl.BlockSpec((b_tile, hidden), lambda i: (i, 0)),                  # mem1 init
        ],
        out_specs=pl.BlockSpec((seq, b_tile, output_dim), lambda i: (0, i, 0)),
        scratch_shapes=[
            pltpu.VMEM((branch, seq * b_tile, hidden), jnp.float32),           # staged FF currents
            pltpu.VMEM((seq * b_tile, hidden), jnp.float32),                   # spike history
        ],
        compiler_params=pltpu.CompilerParams(
            dimension_semantics=("parallel",),      # batch tiles independent (v7x: 2 TensorCores)
            vmem_limit_bytes=vmem_limit,
        ),
        cost_estimate=pl.CostEstimate(flops=flops, transcendentals=0,
                                      bytes_accessed=bytes_accessed),
    )(x_grp, w1_bm, b1_bm, beta_bm, alpha1[None, :], w2s, b2s, alpha2[None, :],
      params["mem1_init"])

    return jnp.transpose(out, (1, 0, 2))                                  # [batch, seq, out]


def dense_denri_forward(x, target, position, params):
    """Full Dense_denri.forward: (loss, d2_output, correct, total)."""
    d2_output = dense_denri_d2_output(x, params)
    batch, seq, _ = d2_output.shape

    thresh = TIME_STEPS - (position + 1) * CODING_TIME                    # (batch,)
    step = jnp.arange(seq)[None, :]                                       # (1, seq)
    mask = step > thresh[:, None]                                         # (batch, seq)

    probs = jax.nn.softmax(d2_output, axis=2)                             # F.softmax(mem2)
    # NOTE: CrossEntropyLoss applied on top of the softmax output (double softmax),
    # faithfully mirroring the reference PyTorch code -- intentional, do not "fix".
    logp = jax.nn.log_softmax(probs, axis=2)
    tgt = target.astype(jnp.int32)
    nll = -jnp.take_along_axis(logp, tgt[..., None], axis=2)[..., 0]      # (batch, seq)

    cnt = jnp.sum(mask.astype(jnp.int32), axis=0)                         # per-timestep masked count
    loss_t = jnp.where(cnt > 0,
                       jnp.sum(jnp.where(mask, nll, 0.0), axis=0) / jnp.maximum(cnt, 1),
                       0.0)
    loss = jnp.sum(loss_t)

    pred = jnp.argmax(probs, axis=2)
    correct = jnp.sum(jnp.where(mask, (pred == tgt).astype(jnp.int32), 0))
    total = jnp.sum(cnt)
    return loss, d2_output, correct, total


# ------------------------- deterministic parameter init ------------------------
def init_params(key, batch, input_size, hidden=HIDDEN_DIMS, branch=BRANCH,
                output_dim=OUTPUT_DIM):
    pad = ((input_size // branch) * branch + branch - input_size) % branch
    ipad = input_size + pad
    hb = hidden * branch
    ks = jax.random.split(key, 8)

    bound1 = 1.0 / math.sqrt(ipad)
    bound2 = 1.0 / math.sqrt(hidden)
    params = {
        "w1": jax.random.uniform(ks[0], (hb, ipad), jnp.float32, -bound1, bound1),
        "b1": jax.random.uniform(ks[1], (hb,), jnp.float32, -bound1, bound1),
        "tau_m1": jax.random.uniform(ks[2], (hidden,), jnp.float32, 0.0, 4.0),
        "tau_n": jax.random.uniform(ks[3], (hidden, branch), jnp.float32, 0.0, 4.0),
        "w2": jax.random.uniform(ks[4], (output_dim, hidden), jnp.float32, -bound2, bound2),
        "b2": jax.random.uniform(ks[5], (output_dim,), jnp.float32, -bound2, bound2),
        "tau_m2": jax.random.uniform(ks[6], (output_dim,), jnp.float32, 0.0, 4.0),
        # TODO(synk): the PyTorch set_neuron_state re-samples mem1 every forward
        # pass; here it is a fixed parameter for deterministic testing.
        "mem1_init": jax.random.uniform(ks[7], (batch, hidden), jnp.float32, 0.0, 1.0),
    }
    # create_mask(): per output neuron, a random permutation of inputs split across branches
    rng = np.random.default_rng(0)
    mask = np.zeros((hb, ipad), np.float32)
    per = ipad // branch
    for n in range(hidden):
        seq_perm = rng.permutation(ipad)
        for j in range(branch):
            mask[n * branch + j, seq_perm[j * per:(j + 1) * per]] = 1.0
    params["mask"] = jnp.asarray(mask)
    return params


# ----------------------------------- main ---------------------------------------
if __name__ == "__main__":
    batch, seq, input_size = 16, TIME_STEPS, 8   # batch=16 -> grid=(2,) over batch tiles

    key = jax.random.PRNGKey(0)
    k_x, k_t, k_p, k_params = jax.random.split(key, 4)

    x = jax.random.bernoulli(k_x, 0.3, (batch, seq, input_size)).astype(jnp.float32)
    target = jax.random.randint(k_t, (batch, seq), 0, OUTPUT_DIM, dtype=jnp.int32)
    position = jax.random.randint(k_p, (batch,), 0, 4, dtype=jnp.int32)

    params = init_params(k_params, batch, input_size)

    loss, d2_output, correct, total = dense_denri_forward(x, target, position, params)
    jax.block_until_ready((loss, d2_output, correct, total))

    assert d2_output.shape == (batch, seq, OUTPUT_DIM)
    assert jnp.all(jnp.isfinite(d2_output))
    assert jnp.isfinite(loss)
    print("KERNEL_OK")
</pallas_src>

<mosaic_0001>
module attributes {stable_mosaic.version = 11 : i64} {
  func.func @_dense_denri_kernel(%arg0: i32, %arg1: memref<1x128x8xbf16, #tpu.memory_space<vmem>>, %arg2: memref<4x8x16xbf16, #tpu.memory_space<vmem>>, %arg3: memref<4x1x16xf32, #tpu.memory_space<vmem>>, %arg4: memref<4x1x16xf32, #tpu.memory_space<vmem>>, %arg5: memref<1x16xf32, #tpu.memory_space<vmem>>, %arg6: memref<16x2xbf16, #tpu.memory_space<vmem>>, %arg7: memref<1x2xf32, #tpu.memory_space<vmem>>, %arg8: memref<1x2xf32, #tpu.memory_space<vmem>>, %arg9: memref<8x16xf32, #tpu.memory_space<vmem>>, %arg10: memref<16x8x2xf32, #tpu.memory_space<vmem>>, %arg11: memref<4x128x16xf32, #tpu.memory_space<vmem>>, %arg12: memref<128x16xf32, #tpu.memory_space<vmem>>) attributes {dimension_semantics = [#tpu.dimension_semantics<parallel>], iteration_bounds = array<i64: 2>, scalar_prefetch = 0 : i64, scratch_operands = 2 : i64, tpu.core_type = #tpu.core_type<tc>, window_params = [{transform_indices = @transform_0, window_bounds = array<i64: 1, 128, 8>}, {pipeline_mode = #tpu.pipeline_mode<synchronous>, transform_indices = @transform_1, window_bounds = array<i64: 4, 8, 16>}, {pipeline_mode = #tpu.pipeline_mode<synchronous>, transform_indices = @transform_2, window_bounds = array<i64: 4, 1, 16>}, {pipeline_mode = #tpu.pipeline_mode<synchronous>, transform_indices = @transform_3, window_bounds = array<i64: 4, 1, 16>}, {pipeline_mode = #tpu.pipeline_mode<synchronous>, transform_indices = @transform_4, window_bounds = array<i64: 1, 16>}, {pipeline_mode = #tpu.pipeline_mode<synchronous>, transform_indices = @transform_5, window_bounds = array<i64: 16, 2>}, {pipeline_mode = #tpu.pipeline_mode<synchronous>, transform_indices = @transform_6, window_bounds = array<i64: 1, 2>}, {pipeline_mode = #tpu.pipeline_mode<synchronous>, transform_indices = @transform_7, window_bounds = array<i64: 1, 2>}, {transform_indices = @transform_8, window_bounds = array<i64: 8, 16>}, {transform_indices = @transform_9, window_bounds = array<i64: 16, 8, 2>}]} {
    %c0 = arith.constant 0 : index
    %c0_0 = arith.constant 0 : index
    %c0_1 = arith.constant 0 : index
    %0 = vector.load %arg1[%c0, %c0_0, %c0_1] : memref<1x128x8xbf16, #tpu.memory_space<vmem>>, vector<1x128x8xbf16>
    %1 = vector.shape_cast %0 : vector<1x128x8xbf16> to vector<128x8xbf16>
    %c0_2 = arith.constant 0 : index
    %c0_3 = arith.constant 0 : index
    %c0_4 = arith.constant 0 : index
    %2 = vector.load %arg2[%c0_2, %c0_3, %c0_4] : memref<4x8x16xbf16, #tpu.memory_space<vmem>>, vector<1x8x16xbf16>
    %3 = vector.shape_cast %2 : vector<1x8x16xbf16> to vector<8x16xbf16>
    %cst = arith.constant dense<0.000000e+00> : vector<128x16xf32>
    %4 = tpu.matmul %1, %3, %cst {dimension_numbers = #tpu.dot_dimension_numbers<[1], [0], [0], [1], [0, 0, 1, 1], [], []>} : vector<128x8xbf16>, vector<8x16xbf16>, vector<128x16xf32> -> vector<128x16xf32>
    %c0_5 = arith.constant 0 : index
    %c0_6 = arith.constant 0 : index
    %c0_7 = arith.constant 0 : index
    %5 = vector.load %arg3[%c0_5, %c0_6, %c0_7] : memref<4x1x16xf32, #tpu.memory_space<vmem>>, vector<1x1x16xf32>
    %6 = vector.shape_cast %5 : vector<1x1x16xf32> to vector<1x16xf32>
    %7 = vector.broadcast %6 : vector<1x16xf32> to vector<128x16xf32>
    %8 = arith.addf %4, %7 : vector<128x16xf32>
    %c0_8 = arith.constant 0 : index
    %c0_9 = arith.constant 0 : index
    %c0_10 = arith.constant 0 : index
    %9 = vector.load %arg11[%c0_8, %c0_9, %c0_10] : memref<4x128x16xf32, #tpu.memory_space<vmem>>, vector<1x128x16xf32>
    %10 = vector.shape_cast %9 : vector<1x128x16xf32> to vector<128x16xf32>
    %11 = vector.shape_cast %8 : vector<128x16xf32> to vector<1x128x16xf32>
    tpu.vector_store %arg11[%c0_8, %c0_9, %c0_10], %11 {strides = array<i32>} : memref<4x128x16xf32, #tpu.memory_space<vmem>>, vector<1x128x16xf32>,
    %c1 = arith.constant 1 : index
    %c0_11 = arith.constant 0 : index
    %c0_12 = arith.constant 0 : index
    %12 = vector.load %arg2[%c1, %c0_11, %c0_12] : memref<4x8x16xbf16, #tpu.memory_space<vmem>>, vector<1x8x16xbf16>
    %13 = vector.shape_cast %12 : vector<1x8x16xbf16> to vector<8x16xbf16>
    %cst_13 = arith.constant dense<0.000000e+00> : vector<128x16xf32>
    %14 = tpu.matmul %1, %13, %cst_13 {dimension_numbers = #tpu.dot_dimension_numbers<[1], [0], [0], [1], [0, 0, 1, 1], [], []>} : vector<128x8xbf16>, vector<8x16xbf16>, vector<128x16xf32> -> vector<128x16xf32>
    %c1_14 = arith.constant 1 : index
    %c0_15 = arith.constant 0 : index
    %c0_16 = arith.constant 0 : index
    %15 = vector.load %arg3[%c1_14, %c0_15, %c0_16] : memref<4x1x16xf32, #tpu.memory_space<vmem>>, vector<1x1x16xf32>
    %16 = vector.shape_cast %15 : vector<1x1x16xf32> to vector<1x16xf32>
    %17 = vector.broadcast %16 : vector<1x16xf32> to vector<128x16xf32>
    %18 = arith.addf %14, %17 : vector<128x16xf32>
    %c1_17 = arith.constant 1 : index
    %c0_18 = arith.constant 0 : index
    %c0_19 = arith.constant 0 : index
    %19 = vector.load %arg11[%c1_17, %c0_18, %c0_19] : memref<4x128x16xf32, #tpu.memory_space<vmem>>, vector<1x128x16xf32>
    %20 = vector.shape_cast %19 : vector<1x128x16xf32> to vector<128x16xf32>
    %21 = vector.shape_cast %18 : vector<128x16xf32> to vector<1x128x16xf32>
    tpu.vector_store %arg11[%c1_17, %c0_18, %c0_19], %21 {strides = array<i32>} : memref<4x128x16xf32, #tpu.memory_space<vmem>>, vector<1x128x16xf32>,
    %c2 = arith.constant 2 : index
    %c0_20 = arith.constant 0 : index
    %c0_21 = arith.constant 0 : index
    %22 = vector.load %arg2[%c2, %c0_20, %c0_21] : memref<4x8x16xbf16, #tpu.memory_space<vmem>>, vector<1x8x16xbf16>
    %23 = vector.shape_cast %22 : vector<1x8x16xbf16> to vector<8x16xbf16>
    %cst_22 = arith.constant dense<0.000000e+00> : vector<128x16xf32>
    %24 = tpu.matmul %1, %23, %cst_22 {dimension_numbers = #tpu.dot_dimension_numbers<[1], [0], [0], [1], [0, 0, 1, 1], [], []>} : vector<128x8xbf16>, vector<8x16xbf16>, vector<128x16xf32> -> vector<128x16xf32>
    %c2_23 = arith.constant 2 : index
    %c0_24 = arith.constant 0 : index
    %c0_25 = arith.constant 0 : index
    %25 = vector.load %arg3[%c2_23, %c0_24, %c0_25] : memref<4x1x16xf32, #tpu.memory_space<vmem>>, vector<1x1x16xf32>
    %26 = vector.shape_cast %25 : vector<1x1x16xf32> to vector<1x16xf32>
    %27 = vector.broadcast %26 : vector<1x16xf32> to vector<128x16xf32>
    %28 = arith.addf %24, %27 : vector<128x16xf32>
    %c2_26 = arith.constant 2 : index
    %c0_27 = arith.constant 0 : index
    %c0_28 = arith.constant 0 : index
    %29 = vector.load %arg11[%c2_26, %c0_27, %c0_28] : memref<4x128x16xf32, #tpu.memory_space<vmem>>, vector<1x128x16xf32>
    %30 = vector.shape_cast %29 : vector<1x128x16xf32> to vector<128x16xf32>
    %31 = vector.shape_cast %28 : vector<128x16xf32> to vector<1x128x16xf32>
    tpu.vector_store %arg11[%c2_26, %c0_27, %c0_28], %31 {strides = array<i32>} : memref<4x128x16xf32, #tpu.memory_space<vmem>>, vector<1x128x16xf32>,
    %c3 = arith.constant 3 : index
    %c0_29 = arith.constant 0 : index
    %c0_30 = arith.constant 0 : index
    %32 = vector.load %arg2[%c3, %c0_29, %c0_30] : memref<4x8x16xbf16, #tpu.memory_space<vmem>>, vector<1x8x16xbf16>
    %33 = vector.shape_cast %32 : vector<1x8x16xbf16> to vector<8x16xbf16>
    %cst_31 = arith.constant dense<0.000000e+00> : vector<128x16xf32>
    %34 = tpu.matmul %1, %33, %cst_31 {dimension_numbers = #tpu.dot_dimension_numbers<[1], [0], [0], [1], [0, 0, 1, 1], [], []>} : vector<128x8xbf16>, vector<8x16xbf16>, vector<128x16xf32> -> vector<128x16xf32>
    %c3_32 = arith.constant 3 : index
    %c0_33 = arith.constant 0 : index
    %c0_34 = arith.constant 0 : index
    %35 = vector.load %arg3[%c3_32, %c0_33, %c0_34] : memref<4x1x16xf32, #tpu.memory_space<vmem>>, vector<1x1x16xf32>
    %36 = vector.shape_cast %35 : vector<1x1x16xf32> to vector<1x16xf32>
    %37 = vector.broadcast %36 : vector<1x16xf32> to vector<128x16xf32>
    %38 = arith.addf %34, %37 : vector<128x16xf32>
    %c3_35 = arith.constant 3 : index
    %c0_36 = arith.constant 0 : index
    %c0_37 = arith.constant 0 : index
    %39 = vector.load %arg11[%c3_35, %c0_36, %c0_37] : memref<4x128x16xf32, #tpu.memory_space<vmem>>, vector<1x128x16xf32>
    %40 = vector.shape_cast %39 : vector<1x128x16xf32> to vector<128x16xf32>
    %41 = vector.shape_cast %38 : vector<128x16xf32> to vector<1x128x16xf32>
    tpu.vector_store %arg11[%c3_35, %c0_36, %c0_37], %41 {strides = array<i32>} : memref<4x128x16xf32, #tpu.memory_space<vmem>>, vector<1x128x16xf32>,
    %c0_38 = arith.constant 0 : index
    %c0_39 = arith.constant 0 : index
    %c0_40 = arith.constant 0 : index
    %42 = vector.load %arg4[%c0_38, %c0_39, %c0_40] : memref<4x1x16xf32, #tpu.memory_space<vmem>>, vector<4x1x16xf32>
    %43 = vector.shape_cast %42 : vector<4x1x16xf32> to vector<4x1x16xf32>
    %44 = vector.broadcast %43 : vector<4x1x16xf32> to vector<4x8x16xf32>
    %c0_41 = arith.constant 0 : index
    %c0_42 = arith.constant 0 : index
    %45 = vector.load %arg5[%c0_41, %c0_42] : memref<1x16xf32, #tpu.memory_space<vmem>>, vector<1x16xf32>
    %46 = vector.shape_cast %45 : vector<1x16xf32> to vector<1x16xf32>
    %47 = vector.broadcast %46 : vector<1x16xf32> to vector<8x16xf32>
    %c0_43 = arith.constant 0 : index
    %c0_44 = arith.constant 0 : index
    %48 = vector.load %arg8[%c0_43, %c0_44] : memref<1x2xf32, #tpu.memory_space<vmem>>, vector<1x2xf32>
    %49 = vector.shape_cast %48 : vector<1x2xf32> to vector<1x2xf32>
    %50 = vector.broadcast %49 : vector<1x2xf32> to vector<8x2xf32>
    %c0_45 = arith.constant 0 : index
    %c0_46 = arith.constant 0 : index
    %51 = vector.load %arg9[%c0_45, %c0_46] : memref<8x16xf32, #tpu.memory_space<vmem>>, vector<8x16xf32>
    %cst_47 = arith.constant 0.000000e+00 : f32
    %52 = vector.broadcast %cst_47 : f32 to vector<8x16xf32>
    %cst_48 = arith.constant 0.000000e+00 : f32
    %53 = vector.broadcast %cst_48 : f32 to vector<4x8x16xf32>
    %c0_i32 = arith.constant 0 : i32
    %c16_i32 = arith.constant 16 : i32
    %54 = arith.addi %c0_i32, %c16_i32 : i32
    %c1_i32 = arith.constant 1 : i32
    %55:3 = scf.for %arg13 = %c0_i32 to %54 step %c1_i32 iter_args(%arg14 = %51, %arg15 = %52, %arg16 = %53) -> (vector<8x16xf32>, vector<8x16xf32>, vector<4x8x16xf32>)  : i32 {
      %c8_i32 = arith.constant 8 : i32
      %130 = arith.muli %arg13, %c8_i32 : i32
      %131 = tpu.assume_multiple %130, 8 : i32
      %c0_61 = arith.constant 0 : index
      %132 = arith.index_cast %131 : i32 to index
      %c0_62 = arith.constant 0 : index
      %133 = vector.load %arg11[%c0_61, %132, %c0_62] : memref<4x128x16xf32, #tpu.memory_space<vmem>>, vector<4x8x16xf32>
      %134 = arith.mulf %44, %arg16 : vector<4x8x16xf32>
      %135 = arith.addf %134, %133 : vector<4x8x16xf32>
      %136 = vector.extract_strided_slice %135 {offsets = [0, 0, 0], sizes = [1, 8, 16], strides = [1, 1, 1]} : vector<4x8x16xf32> to vector<1x8x16xf32>
      %137 = vector.shape_cast %136 : vector<1x8x16xf32> to vector<8x16xf32>
      %138 = vector.extract_strided_slice %135 {offsets = [1, 0, 0], sizes = [1, 8, 16], strides = [1, 1, 1]} : vector<4x8x16xf32> to vector<1x8x16xf32>
      %139 = vector.shape_cast %138 : vector<1x8x16xf32> to vector<8x16xf32>
      %140 = arith.addf %137, %139 : vector<8x16xf32>
      %141 = vector.extract_strided_slice %135 {offsets = [2, 0, 0], sizes = [1, 8, 16], strides = [1, 1, 1]} : vector<4x8x16xf32> to vector<1x8x16xf32>
      %142 = vector.shape_cast %141 : vector<1x8x16xf32> to vector<8x16xf32>
      %143 = arith.addf %140, %142 : vector<8x16xf32>
      %144 = vector.extract_strided_slice %135 {offsets = [3, 0, 0], sizes = [1, 8, 16], strides = [1, 1, 1]} : vector<4x8x16xf32> to vector<1x8x16xf32>
      %145 = vector.shape_cast %144 : vector<1x8x16xf32> to vector<8x16xf32>
      %146 = arith.addf %143, %145 : vector<8x16xf32>
      %147 = arith.mulf %arg14, %47 : vector<8x16xf32>
      %148 = arith.addf %147, %146 : vector<8x16xf32>
      %149 = arith.subf %148, %arg15 : vector<8x16xf32>
      %cst_63 = arith.constant 1.000000e+00 : f32
      %150 = vector.broadcast %cst_63 : f32 to vector<8x16xf32>
      %151 = arith.cmpf ogt, %149, %150 : vector<8x16xf32>
      %152 = arith.extui %151 : vector<8x16xi1> to vector<8x16xi32>
      %153 = arith.sitofp %152 : vector<8x16xi32> to vector<8x16xf32>
      %154 = arith.index_cast %131 : i32 to index
      %c0_64 = arith.constant 0 : index
      %155 = vector.load %arg12[%154, %c0_64] : memref<128x16xf32, #tpu.memory_space<vmem>>, vector<8x16xf32>
      tpu.vector_store %arg12[%154, %c0_64], %153 {strides = array<i32>} : memref<128x16xf32, #tpu.memory_space<vmem>>, vector<8x16xf32>,
      scf.yield %149, %153, %135 : vector<8x16xf32>, vector<8x16xf32>, vector<4x8x16xf32>
    }
    %c16_i32_49 = arith.constant 16 : i32
    %c0_50 = arith.constant 0 : index
    %c0_51 = arith.constant 0 : index
    %56 = vector.load %arg12[%c0_50, %c0_51] : memref<128x16xf32, #tpu.memory_space<vmem>>, vector<128x16xf32>
    %57 = arith.truncf %56 : vector<128x16xf32> to vector<128x16xbf16>
    %c0_52 = arith.constant 0 : index
    %c0_53 = arith.constant 0 : index
    %58 = vector.load %arg6[%c0_52, %c0_53] : memref<16x2xbf16, #tpu.memory_space<vmem>>, vector<16x2xbf16>
    %cst_54 = arith.constant dense<0.000000e+00> : vector<128x2xf32>
    %59 = tpu.matmul %57, %58, %cst_54 {dimension_numbers = #tpu.dot_dimension_numbers<[1], [0], [0], [1], [0, 0, 1, 1], [], []>} : vector<128x16xbf16>, vector<16x2xbf16>, vector<128x2xf32> -> vector<128x2xf32>
    %c0_55 = arith.constant 0 : index
    %c0_56 = arith.constant 0 : index
    %60 = vector.load %arg7[%c0_55, %c0_56] : memref<1x2xf32, #tpu.memory_space<vmem>>, vector<1x2xf32>
    %61 = vector.broadcast %60 : vector<1x2xf32> to vector<128x2xf32>
    %62 = arith.addf %59, %61 : vector<128x2xf32>
    %cst_57 = arith.constant 0.000000e+00 : f32
    %63 = vector.broadcast %cst_57 : f32 to vector<8x2xf32>
    %64 = arith.mulf %63, %50 : vector<8x2xf32>
    %65 = vector.extract_strided_slice %62 {offsets = [0, 0], sizes = [8, 2], strides = [1, 1]} : vector<128x2xf32> to vector<8x2xf32>
    %66 = arith.addf %64, %65 : vector<8x2xf32>
    %67 = arith.mulf %66, %50 : vector<8x2xf32>
    %68 = vector.extract_strided_slice %62 {offsets = [8, 0], sizes = [8, 2], strides = [1, 1]} : vector<128x2xf32> to vector<8x2xf32>
    %69 = arith.addf %67, %68 : vector<8x2xf32>
    %70 = arith.mulf %69, %50 : vector<8x2xf32>
    %71 = vector.extract_strided_slice %62 {offsets = [16, 0], sizes = [8, 2], strides = [1, 1]} : vector<128x2xf32> to vector<8x2xf32>
    %72 = arith.addf %70, %71 : vector<8x2xf32>
    %73 = arith.mulf %72, %50 : vector<8x2xf32>
    %74 = vector.extract_strided_slice %62 {offsets = [24, 0], sizes = [8, 2], strides = [1, 1]} : vector<128x2xf32> to vector<8x2xf32>
    %75 = arith.addf %73, %74 : vector<8x2xf32>
    %76 = arith.mulf %75, %50 : vector<8x2xf32>
    %77 = vector.extract_strided_slice %62 {offsets = [32, 0], sizes = [8, 2], strides = [1, 1]} : vector<128x2xf32> to vector<8x2xf32>
    %78 = arith.addf %76, %77 : vector<8x2xf32>
    %79 = arith.mulf %78, %50 : vector<8x2xf32>
    %80 = vector.extract_strided_slice %62 {offsets = [40, 0], sizes = [8, 2], strides = [1, 1]} : vector<128x2xf32> to vector<8x2xf32>
    %81 = arith.addf %79, %80 : vector<8x2xf32>
    %82 = arith.mulf %81, %50 : vector<8x2xf32>
    %83 = vector.extract_strided_slice %62 {offsets = [48, 0], sizes = [8, 2], strides = [1, 1]} : vector<128x2xf32> to vector<8x2xf32>
    %84 = arith.addf %82, %83 : vector<8x2xf32>
    %85 = arith.mulf %84, %50 : vector<8x2xf32>
    %86 = vector.extract_strided_slice %62 {offsets = [56, 0], sizes = [8, 2], strides = [1, 1]} : vector<128x2xf32> to vector<8x2xf32>
    %87 = arith.addf %85, %86 : vector<8x2xf32>
    %88 = arith.mulf %87, %50 : vector<8x2xf32>
    %89 = vector.extract_strided_slice %62 {offsets = [64, 0], sizes = [8, 2], strides = [1, 1]} : vector<128x2xf32> to vector<8x2xf32>
    %90 = arith.addf %88, %89 : vector<8x2xf32>
    %91 = arith.mulf %90, %50 : vector<8x2xf32>
    %92 = vector.extract_strided_slice %62 {offsets = [72, 0], sizes = [8, 2], strides = [1, 1]} : vector<128x2xf32> to vector<8x2xf32>
    %93 = arith.addf %91, %92 : vector<8x2xf32>
    %94 = arith.mulf %93, %50 : vector<8x2xf32>
    %95 = vector.extract_strided_slice %62 {offsets = [80, 0], sizes = [8, 2], strides = [1, 1]} : vector<128x2xf32> to vector<8x2xf32>
    %96 = arith.addf %94, %95 : vector<8x2xf32>
    %97 = arith.mulf %96, %50 : vector<8x2xf32>
    %98 = vector.extract_strided_slice %62 {offsets = [88, 0], sizes = [8, 2], strides = [1, 1]} : vector<128x2xf32> to vector<8x2xf32>
    %99 = arith.addf %97, %98 : vector<8x2xf32>
    %100 = arith.mulf %99, %50 : vector<8x2xf32>
    %101 = vector.extract_strided_slice %62 {offsets = [96, 0], sizes = [8, 2], strides = [1, 1]} : vector<128x2xf32> to vector<8x2xf32>
    %102 = arith.addf %100, %101 : vector<8x2xf32>
    %103 = arith.mulf %102, %50 : vector<8x2xf32>
    %104 = vector.extract_strided_slice %62 {offsets = [104, 0], sizes = [8, 2], strides = [1, 1]} : vector<128x2xf32> to vector<8x2xf32>
    %105 = arith.addf %103, %104 : vector<8x2xf32>
    %106 = arith.mulf %105, %50 : vector<8x2xf32>
    %107 = vector.extract_strided_slice %62 {offsets = [112, 0], sizes = [8, 2], strides = [1, 1]} : vector<128x2xf32> to vector<8x2xf32>
    %108 = arith.addf %106, %107 : vector<8x2xf32>
    %109 = arith.mulf %108, %50 : vector<8x2xf32>
    %110 = vector.extract_strided_slice %62 {offsets = [120, 0], sizes = [8, 2], strides = [1, 1]} : vector<128x2xf32> to vector<8x2xf32>
    %111 = arith.addf %109, %110 : vector<8x2xf32>
    %112 = vector.shape_cast %66 : vector<8x2xf32> to vector<1x8x2xf32>
    %113 = vector.shape_cast %69 : vector<8x2xf32> to vector<1x8x2xf32>
    %114 = vector.shape_cast %72 : vector<8x2xf32> to vector<1x8x2xf32>
    %115 = vector.shape_cast %75 : vector<8x2xf32> to vector<1x8x2xf32>
    %116 = vector.shape_cast %78 : vector<8x2xf32> to vector<1x8x2xf32>
    %117 = vector.shape_cast %81 : vector<8x2xf32> to vector<1x8x2xf32>
    %118 = vector.shape_cast %84 : vector<8x2xf32> to vector<1x8x2xf32>
    %119 = vector.shape_cast %87 : vector<8x2xf32> to vector<1x8x2xf32>
    %120 = vector.shape_cast %90 : vector<8x2xf32> to vector<1x8x2xf32>
    %121 = vector.shape_cast %93 : vector<8x2xf32> to vector<1x8x2xf32>
    %122 = vector.shape_cast %96 : vector<8x2xf32> to vector<1x8x2xf32>
    %123 = vector.shape_cast %99 : vector<8x2xf32> to vector<1x8x2xf32>
    %124 = vector.shape_cast %102 : vector<8x2xf32> to vector<1x8x2xf32>
    %125 = vector.shape_cast %105 : vector<8x2xf32> to vector<1x8x2xf32>
    %126 = vector.shape_cast %108 : vector<8x2xf32> to vector<1x8x2xf32>
    %127 = vector.shape_cast %111 : vector<8x2xf32> to vector<1x8x2xf32>
    %128 = tpu.concatenate %112, %113, %114, %115, %116, %117, %118, %119, %120, %121, %122, %123, %124, %125, %126, %127 in 0 : vector<1x8x2xf32>, vector<1x8x2xf32>, vector<1x8x2xf32>, vector<1x8x2xf32>, vector<1x8x2xf32>, vector<1x8x2xf32>, vector<1x8x2xf32>, vector<1x8x2xf32>, vector<1x8x2xf32>, vector<1x8x2xf32>, vector<1x8x2xf32>, vector<1x8x2xf32>, vector<1x8x2xf32>, vector<1x8x2xf32>, vector<1x8x2xf32>, vector<1x8x2xf32> -> vector<16x8x2xf32>
    %c0_58 = arith.constant 0 : index
    %c0_59 = arith.constant 0 : index
    %c0_60 = arith.constant 0 : index
    %129 = vector.load %arg10[%c0_58, %c0_59, %c0_60] : memref<16x8x2xf32, #tpu.memory_space<vmem>>, vector<16x8x2xf32>
    tpu.vector_store %arg10[%c0_58, %c0_59, %c0_60], %128 {strides = array<i32>} : memref<16x8x2xf32, #tpu.memory_space<vmem>>, vector<16x8x2xf32>,
    return
  }
  func.func @transform_0(%arg0: i32) -> (i32, i32, i32) {
    %c0_i32 = arith.constant 0 : i32
    %c0_i32_0 = arith.constant 0 : i32
    %c0_i32_1 = arith.constant 0 : i32
    return %arg0, %c0_i32, %c0_i32_0 : i32, i32, i32
  }
  func.func @transform_1(%arg0: i32) -> (i32, i32, i32) {
    %c0_i32 = arith.constant 0 : i32
    %c0_i32_0 = arith.constant 0 : i32
    %c0_i32_1 = arith.constant 0 : i32
    %c0_i32_2 = arith.constant 0 : i32
    return %c0_i32, %c0_i32_0, %c0_i32_1 : i32, i32, i32
  }
  func.func @transform_2(%arg0: i32) -> (i32, i32, i32) {
    %c0_i32 = arith.constant 0 : i32
    %c0_i32_0 = arith.constant 0 : i32
    %c0_i32_1 = arith.constant 0 : i32
    %c0_i32_2 = arith.constant 0 : i32
    return %c0_i32, %c0_i32_0, %c0_i32_1 : i32, i32, i32
  }
  func.func @transform_3(%arg0: i32) -> (i32, i32, i32) {
    %c0_i32 = arith.constant 0 : i32
    %c0_i32_0 = arith.constant 0 : i32
    %c0_i32_1 = arith.constant 0 : i32
    %c0_i32_2 = arith.constant 0 : i32
    return %c0_i32, %c0_i32_0, %c0_i32_1 : i32, i32, i32
  }
  func.func @transform_4(%arg0: i32) -> (i32, i32) {
    %c0_i32 = arith.constant 0 : i32
    %c0_i32_0 = arith.constant 0 : i32
    %c0_i32_1 = arith.constant 0 : i32
    return %c0_i32, %c0_i32_0 : i32, i32
  }
  func.func @transform_5(%arg0: i32) -> (i32, i32) {
    %c0_i32 = arith.constant 0 : i32
    %c0_i32_0 = arith.constant 0 : i32
    %c0_i32_1 = arith.constant 0 : i32
    return %c0_i32, %c0_i32_0 : i32, i32
  }
  func.func @transform_6(%arg0: i32) -> (i32, i32) {
    %c0_i32 = arith.constant 0 : i32
    %c0_i32_0 = arith.constant 0 : i32
    %c0_i32_1 = arith.constant 0 : i32
    return %c0_i32, %c0_i32_0 : i32, i32
  }
  func.func @transform_7(%arg0: i32) -> (i32, i32) {
    %c0_i32 = arith.constant 0 : i32
    %c0_i32_0 = arith.constant 0 : i32
    %c0_i32_1 = arith.constant 0 : i32
    return %c0_i32, %c0_i32_0 : i32, i32
  }
  func.func @transform_8(%arg0: i32) -> (i32, i32) {
    %c0_i32 = arith.constant 0 : i32
    %c0_i32_0 = arith.constant 0 : i32
    return %arg0, %c0_i32 : i32, i32
  }
  func.func @transform_9(%arg0: i32) -> (i32, i32, i32) {
    %c0_i32 = arith.constant 0 : i32
    %c0_i32_0 = arith.constant 0 : i32
    %c0_i32_1 = arith.constant 0 : i32
    return %c0_i32, %arg0, %c0_i32_0 : i32, i32, i32
  }
}

</mosaic_0001>

<llo_original>
// kernel: tpu_custom_call.1
$region0: #{tpu_custom_call.1}
  #allocation0 [shape = 'u32[]', space=smem, size = 0x4, offset = 0x4, fixed_abs, tag = 'smem constant byte address 0x4 - core index']
  #allocation1 [shape = 'u32[144,128]{1,0:T(1,128)}', space=vmem, size = 0x12000, scoped, tag = 'internal scratch']
  #allocation2 [shape = 'f32[4,128,16]{2,1,0:T(8,128)}', space=vmem, size = 0x40000, scoped, tag = 'scratch operand']
  #allocation3 [shape = 'f32[128,16]{1,0:T(8,128)}', space=vmem, size = 0x10000, scoped, tag = 'scratch operand']
  %s0 = inlined_call_operand.vmem [shape: bf16[2,128,8], index: 0, kind: input, shape index: {}]
  %s1 = inlined_call_operand.vmem [shape: bf16[4,8,16], index: 1, kind: input, shape index: {}]
  %s2 = inlined_call_operand.vmem [shape: f32[4,1,16], index: 2, kind: input, shape index: {}]
  %s3 = inlined_call_operand.vmem [shape: f32[4,1,16], index: 3, kind: input, shape index: {}]
  %s4 = inlined_call_operand.vmem [shape: f32[1,16], index: 4, kind: input, shape index: {}]
  %s5 = inlined_call_operand.vmem [shape: bf16[16,2], index: 5, kind: input, shape index: {}]
  %s6 = inlined_call_operand.vmem [shape: f32[1,2], index: 6, kind: input, shape index: {}]
  %s7 = inlined_call_operand.vmem [shape: f32[1,2], index: 7, kind: input, shape index: {}]
  %s8 = inlined_call_operand.vmem [shape: f32[16,16], index: 8, kind: input, shape index: {}]
  %s9 = inlined_call_operand.vmem [shape: f32[16,16,2], index: 9, kind: output, shape index: {}]
  %s10 = sld [smem:[#allocation0]]
  $region110: #{tpu_custom_call.1} parent=0
    _
  %s12 = ssub.s32 1, %s10
  %s13 = scalar_select 0, %s12, %s10
  $region1: #{tpu_custom_call.1} parent=0
    #allocation4 [shape = 'u8[131072]{0}', space=vmem, size = 0x20000, scoped, tag = 'output window, operand 0']
    loop: start=0, step=1, limit=4
    $region2: #{tpu_custom_call.1} parent=1 // loop_pre_header
      _
    $region3: #{tpu_custom_call.1} parent=1 // loop_header
      %s15 = sphi 0, %s19
      %p16 = scmp.ge.s32.totalorder %s15, 4
      %s25 = sphi 0, %s27
      %s28 = sphi 0, %s25
      %s29 = sphi 0, %s28
      %s45 = sphi 0, %s29
      %s49 = sphi 0, %s49
      %s51 = sphi 0, %s49
      %s52 = sphi 0, %s51
      %s66 = sphi 0, %s52
      %s70 = sphi 0, %s70
      %s72 = sphi 0, %s70
      %s73 = sphi 0, %s72
      %s87 = sphi 0, %s73
      %s91 = sphi 0, %s91
      %s93 = sphi 0, %s91
      %s94 = sphi 0, %s93
      %s108 = sphi 0, %s94
      %s112 = sphi 0, %s112
      %s114 = sphi 0, %s112
      %s115 = sphi 0, %s114
      %s129 = sphi 0, %s115
      %s133 = sphi 0, %s133
      %s135 = sphi 0, %s133
      %s136 = sphi 0, %s135
      %s150 = sphi 0, %s136
      %s154 = sphi 0, %s154
      %s156 = sphi 0, %s154
      %s157 = sphi 0, %s156
      %s171 = sphi 0, %s157
      %s175 = sphi 0, %s175
      %s177 = sphi 0, %s175
      %s178 = sphi 0, %s177
      %s192 = sphi 0, %s178
      %s198 = sphi 0, %s200
      %s201 = sphi 0, %s198
      %s202 = sphi 0, %s201
      %s218 = sphi 0, %s202
      %s224 = sphi 0, %s226
      %s227 = sphi 0, %s224
      %s228 = sphi 0, %s227
      %s244 = sphi 0, %s228
    $region4: #{tpu_custom_call.1} parent=1 // loop_header_branch
      %18 = sbr.rel (%p16) target = $region8
    $region5: #{tpu_custom_call.1} parent=1 // loop_body
      %s20 = ssub.s32 %s15, 1
      %s21 = ssub.s32 %s15, 2
      %s22 = sadd.s32 %s15, 1
      %s23 = ssub.s32 %s15, %s22
      %p24 = scmp.eq.s32.totalorder %s23, 0
      %s26 = sadd.s32 %s25, 1
      %s27 = scalar_select %p24, %s25, %s26
      %p30 = pneg %p24
      %p31 = scmp.eq.s32.totalorder %s15, 1
      %p32 = por %p30, %p31
      %p33 = scmp.ne.s32.totalorder %s25, %s28
      %p34 = scmp.eq.s32.totalorder %s15, 0
      %p35 = por %p33, %p34
      %p36 = scmp.ne.s32.totalorder %s25, %s28
      %p37 = scmp.eq.s32.totalorder %s20, 1
      %p38 = por %p36, %p37
      %p39 = scmp.ne.s32.totalorder %s28, %s29
      %p40 = scmp.eq.s32.totalorder %s20, 0
      %p41 = por %p39, %p40
      %p42 = scmp.ne.s32.totalorder %s28, %s29
      %p43 = scmp.eq.s32.totalorder %s21, 1
      %p44 = por %p42, %p43
      %p46 = scmp.ne.s32.totalorder %s29, %s45
      %p47 = scmp.eq.s32.totalorder %s21, 0
      %p48 = por %p46, %p47
      %s50 = sadd.s32 %s49, 1
      %p53 = scmp.eq.s32.totalorder %s15, 1
      %p54 = scmp.ne.s32.totalorder %s49, %s51
      %p55 = scmp.eq.s32.totalorder %s15, 0
      %p56 = por %p54, %p55
      %p57 = scmp.ne.s32.totalorder %s49, %s51
      %p58 = scmp.eq.s32.totalorder %s20, 1
      %p59 = por %p57, %p58
      %p60 = scmp.ne.s32.totalorder %s51, %s52
      %p61 = scmp.eq.s32.totalorder %s20, 0
      %p62 = por %p60, %p61
      %p63 = scmp.ne.s32.totalorder %s51, %s52
      %p64 = scmp.eq.s32.totalorder %s21, 1
      %p65 = por %p63, %p64
      %p67 = scmp.ne.s32.totalorder %s52, %s66
      %p68 = scmp.eq.s32.totalorder %s21, 0
      %p69 = por %p67, %p68
      %s71 = sadd.s32 %s70, 1
      %p74 = scmp.eq.s32.totalorder %s15, 1
      %p75 = scmp.ne.s32.totalorder %s70, %s72
      %p76 = scmp.eq.s32.totalorder %s15, 0
      %p77 = por %p75, %p76
      %p78 = scmp.ne.s32.totalorder %s70, %s72
      %p79 = scmp.eq.s32.totalorder %s20, 1
      %p80 = por %p78, %p79
      %p81 = scmp.ne.s32.totalorder %s72, %s73
      %p82 = scmp.eq.s32.totalorder %s20, 0
      %p83 = por %p81, %p82
      %p84 = scmp.ne.s32.totalorder %s72, %s73
      %p85 = scmp.eq.s32.totalorder %s21, 1
      %p86 = por %p84, %p85
      %p88 = scmp.ne.s32.totalorder %s73, %s87
      %p89 = scmp.eq.s32.totalorder %s21, 0
      %p90 = por %p88, %p89
      %s92 = sadd.s32 %s91, 1
      %p95 = scmp.eq.s32.totalorder %s15, 1
      %p96 = scmp.ne.s32.totalorder %s91, %s93
      %p97 = scmp.eq.s32.totalorder %s15, 0
      %p98 = por %p96, %p97
      %p99 = scmp.ne.s32.totalorder %s91, %s93
      %p100 = scmp.eq.s32.totalorder %s20, 1
      %p101 = por %p99, %p100
      %p102 = scmp.ne.s32.totalorder %s93, %s94
      %p103 = scmp.eq.s32.totalorder %s20, 0
      %p104 = por %p102, %p103
      %p105 = scmp.ne.s32.totalorder %s93, %s94
      %p106 = scmp.eq.s32.totalorder %s21, 1
      %p107 = por %p105, %p106
      %p109 = scmp.ne.s32.totalorder %s94, %s108
      %p110 = scmp.eq.s32.totalorder %s21, 0
      %p111 = por %p109, %p110
      %s113 = sadd.s32 %s112, 1
      %p116 = scmp.eq.s32.totalorder %s15, 1
      %p117 = scmp.ne.s32.totalorder %s112, %s114
      %p118 = scmp.eq.s32.totalorder %s15, 0
      %p119 = por %p117, %p118
      %p120 = scmp.ne.s32.totalorder %s112, %s114
      %p121 = scmp.eq.s32.totalorder %s20, 1
      %p122 = por %p120, %p121
      %p123 = scmp.ne.s32.totalorder %s114, %s115
      %p124 = scmp.eq.s32.totalorder %s20, 0
      %p125 = por %p123, %p124
      %p126 = scmp.ne.s32.totalorder %s114, %s115
      %p127 = scmp.eq.s32.totalorder %s21, 1
      %p128 = por %p126, %p127
      %p130 = scmp.ne.s32.totalorder %s115, %s129
      %p131 = scmp.eq.s32.totalorder %s21, 0
      %p132 = por %p130, %p131
      %s134 = sadd.s32 %s133, 1
      %p137 = scmp.eq.s32.totalorder %s15, 1
      %p138 = scmp.ne.s32.totalorder %s133, %s135
      %p139 = scmp.eq.s32.totalorder %s15, 0
      %p140 = por %p138, %p139
      %p141 = scmp.ne.s32.totalorder %s133, %s135
      %p142 = scmp.eq.s32.totalorder %s20, 1
      %p143 = por %p141, %p142
      %p144 = scmp.ne.s32.totalorder %s135, %s136
      %p145 = scmp.eq.s32.totalorder %s20, 0
      %p146 = por %p144, %p145
      %p147 = scmp.ne.s32.totalorder %s135, %s136
      %p148 = scmp.eq.s32.totalorder %s21, 1
      %p149 = por %p147, %p148
      %p151 = scmp.ne.s32.totalorder %s136, %s150
      %p152 = scmp.eq.s32.totalorder %s21, 0
      %p153 = por %p151, %p152
      %s155 = sadd.s32 %s154, 1
      %p158 = scmp.eq.s32.totalorder %s15, 1
      %p159 = scmp.ne.s32.totalorder %s154, %s156
      %p160 = scmp.eq.s32.totalorder %s15, 0
      %p161 = por %p159, %p160
      %p162 = scmp.ne.s32.totalorder %s154, %s156
      %p163 = scmp.eq.s32.totalorder %s20, 1
      %p164 = por %p162, %p163
      %p165 = scmp.ne.s32.totalorder %s156, %s157
      %p166 = scmp.eq.s32.totalorder %s20, 0
      %p167 = por %p165, %p166
      %p168 = scmp.ne.s32.totalorder %s156, %s157
      %p169 = scmp.eq.s32.totalorder %s21, 1
      %p170 = por %p168, %p169
      %p172 = scmp.ne.s32.totalorder %s157, %s171
      %p173 = scmp.eq.s32.totalorder %s21, 0
      %p174 = por %p172, %p173
      %s176 = sadd.s32 %s175, 1
      %p179 = scmp.eq.s32.totalorder %s15, 1
      %p180 = scmp.ne.s32.totalorder %s175, %s177
      %p181 = scmp.eq.s32.totalorder %s15, 0
      %p182 = por %p180, %p181
      %p183 = scmp.ne.s32.totalorder %s175, %s177
      %p184 = scmp.eq.s32.totalorder %s20, 1
      %p185 = por %p183, %p184
      %p186 = scmp.ne.s32.totalorder %s177, %s178
      %p187 = scmp.eq.s32.totalorder %s20, 0
      %p188 = por %p186, %p187
      %p189 = scmp.ne.s32.totalorder %s177, %s178
      %p190 = scmp.eq.s32.totalorder %s21, 1
      %p191 = por %p189, %p190
      %p193 = scmp.ne.s32.totalorder %s178, %s192
      %p194 = scmp.eq.s32.totalorder %s21, 0
      %p195 = por %p193, %p194
      %s196 = ssub.s32 %s15, %s22
      %p197 = scmp.eq.s32.totalorder %s196, 0
      %s199 = sadd.s32 %s198, 1
      %s200 = scalar_select %p197, %s198, %s199
      %p203 = pneg %p197
      %p204 = scmp.eq.s32.totalorder %s15, 1
      %p205 = por %p203, %p204
      %p206 = scmp.ne.s32.totalorder %s198, %s201
      %p207 = scmp.eq.s32.totalorder %s15, 0
      %p208 = por %p206, %p207
      %p209 = scmp.ne.s32.totalorder %s198, %s201
      %p210 = scmp.eq.s32.totalorder %s20, 1
      %p211 = por %p209, %p210
      %p212 = scmp.ne.s32.totalorder %s201, %s202
      %p213 = scmp.eq.s32.totalorder %s20, 0
      %p214 = por %p212, %p213
      %p215 = scmp.ne.s32.totalorder %s201, %s202
      %p216 = scmp.eq.s32.totalorder %s21, 1
      %p217 = por %p215, %p216
      %p219 = scmp.ne.s32.totalorder %s202, %s218
      %p220 = scmp.eq.s32.totalorder %s21, 0
      %p221 = por %p219, %p220
      %s222 = ssub.s32 %s15, %s22
      %p223 = scmp.eq.s32.totalorder %s222, 0
      %s225 = sadd.s32 %s224, 1
      %s226 = scalar_select %p223, %s224, %s225
      %p229 = pneg %p223
      %p230 = scmp.eq.s32.totalorder %s15, 1
      %p231 = por %p229, %p230
      %p232 = scmp.ne.s32.totalorder %s224, %s227
      %p233 = scmp.eq.s32.totalorder %s15, 0
      %p234 = por %p232, %p233
      %p235 = scmp.ne.s32.totalorder %s224, %s227
      %p236 = scmp.eq.s32.totalorder %s20, 1
      %p237 = por %p235, %p236
      %p238 = scmp.ne.s32.totalorder %s227, %s228
      %p239 = scmp.eq.s32.totalorder %s20, 0
      %p240 = por %p238, %p239
      %p241 = scmp.ne.s32.totalorder %s227, %s228
      %p242 = scmp.eq.s32.totalorder %s21, 1
      %p243 = por %p241, %p242
      %p245 = scmp.ne.s32.totalorder %s228, %s244
      %p246 = scmp.eq.s32.totalorder %s21, 0
      %p247 = por %p245, %p246
      %p248 = scmp.le.s32.totalorder 1, %s15
      %p249 = scmp.lt.s32.totalorder %s15, 3
      %p250 = pnand %p248, %p249
      %p251 = pneg %p250
      // Predicated region
      $region9: #{tpu_custom_call.1} parent=5 // pred_check
        _
      $region10: #{tpu_custom_call.1} parent=5 // pred_check_branch
        %253 = sbr.rel (%p250) target = $region12
      $region11: #{tpu_custom_call.1} parent=5 // pred_region
        %s254 = ssub.s32 %s15, 1
        // Predicated region
        $region13: #{tpu_custom_call.1} parent=11 // pred_check
          %p255 = pneg %p62
        $region14: #{tpu_custom_call.1} parent=11 // pred_check_branch
          %257 = sbr.rel (%p255) target = $region16
        $region15: #{tpu_custom_call.1} parent=11 // pred_region
          _
        $region16: #{tpu_custom_call.1} parent=11 // pred_fallthru
          _
        // Predicated region
        $region17: #{tpu_custom_call.1} parent=11 // pred_check
          %p258 = pneg %p83
        $region18: #{tpu_custom_call.1} parent=11 // pred_check_branch
          %260 = sbr.rel (%p258) target = $region20
        $region19: #{tpu_custom_call.1} parent=11 // pred_region
          _
        $region20: #{tpu_custom_call.1} parent=11 // pred_fallthru
          _
        // Predicated region
        $region21: #{tpu_custom_call.1} parent=11 // pred_check
          %p261 = pneg %p104
        $region22: #{tpu_custom_call.1} parent=11 // pred_check_branch
          %263 = sbr.rel (%p261) target = $region24
        $region23: #{tpu_custom_call.1} parent=11 // pred_region
          _
        $region24: #{tpu_custom_call.1} parent=11 // pred_fallthru
          _
        // Predicated region
        $region25: #{tpu_custom_call.1} parent=11 // pred_check
          %p264 = pneg %p125
        $region26: #{tpu_custom_call.1} parent=11 // pred_check_branch
          %266 = sbr.rel (%p264) target = $region28
        $region27: #{tpu_custom_call.1} parent=11 // pred_region
          _
        $region28: #{tpu_custom_call.1} parent=11 // pred_fallthru
          _
        // Predicated region
        $region29: #{tpu_custom_call.1} parent=11 // pred_check
          %p267 = pneg %p146
        $region30: #{tpu_custom_call.1} parent=11 // pred_check_branch
          %269 = sbr.rel (%p267) target = $region32
        $region31: #{tpu_custom_call.1} parent=11 // pred_region
          _
        $region32: #{tpu_custom_call.1} parent=11 // pred_fallthru
          _
        // Predicated region
        $region33: #{tpu_custom_call.1} parent=11 // pred_check
          %p270 = pneg %p167
        $region34: #{tpu_custom_call.1} parent=11 // pred_check_branch
          %272 = sbr.rel (%p270) target = $region36
        $region35: #{tpu_custom_call.1} parent=11 // pred_region
          _
        $region36: #{tpu_custom_call.1} parent=11 // pred_fallthru
          _
        // Predicated region
        $region37: #{tpu_custom_call.1} parent=11 // pred_check
          %p273 = pneg %p188
        $region38: #{tpu_custom_call.1} parent=11 // pred_check_branch
          %275 = sbr.rel (%p273) target = $region40
        $region39: #{tpu_custom_call.1} parent=11 // pred_region
          _
        $region40: #{tpu_custom_call.1} parent=11 // pred_fallthru
          _
      $region12: #{tpu_custom_call.1} parent=5 // pred_fallthru
        _
      %p276 = scmp.lt.s32.totalorder %s15, 2
      // Predicated region
      $region41: #{tpu_custom_call.1} parent=5 // pred_check
        %p277 = pneg %p276
      $region42: #{tpu_custom_call.1} parent=5 // pred_check_branch
        %279 = sbr.rel (%p277) target = $region44
      $region43: #{tpu_custom_call.1} parent=5 // pred_region
        // Predicated region
        $region45: #{tpu_custom_call.1} parent=43 // pred_check
          %p280 = pneg %p35
        $region46: #{tpu_custom_call.1} parent=43 // pred_check_branch
          %282 = sbr.rel (%p280) target = $region48
        $region47: #{tpu_custom_call.1} parent=43 // pred_region
          %p283 = scmp.lt.s32.totalorder %s15, 1
          %s284 = scalar_select %p283, %s15, 1
          %s285 = smul.addr %s284, 16
          %s286 = smul.addr %s285, 4
          %s287 = scalar_lea.vmem %s0, %s286
        $region48: #{tpu_custom_call.1} parent=43 // pred_fallthru
          _
        // Predicated region
        $region49: #{tpu_custom_call.1} parent=43 // pred_check
          %p288 = pneg %p208
        $region50: #{tpu_custom_call.1} parent=43 // pred_check_branch
          %290 = sbr.rel (%p288) target = $region52
        $region51: #{tpu_custom_call.1} parent=43 // pred_region
          %p291 = scmp.lt.s32.totalorder %s15, 1
          %s292 = scalar_select %p291, %s15, 1
          %s293 = smul.addr %s292, 8
          %s294 = scalar_lea.vmem %s8, %s293
        $region52: #{tpu_custom_call.1} parent=43 // pred_fallthru
          _
      $region44: #{tpu_custom_call.1} parent=5 // pred_fallthru
        _
      %p295 = scmp.le.s32.totalorder 1, %s15
      %p296 = scmp.lt.s32.totalorder %s15, 3
      %p297 = pnand %p295, %p296
      %p298 = pneg %p297
      // Predicated region
      $region53: #{tpu_custom_call.1} parent=5 // pred_check
        _
      $region54: #{tpu_custom_call.1} parent=5 // pred_check_branch
        %300 = sbr.rel (%p297) target = $region56
      $region55: #{tpu_custom_call.1} parent=5 // pred_region
        %s301 = ssub.s32 %s15, 1
        %p302 = scmp.lt.s32.totalorder %s20, 1
        %s303 = scalar_select %p302, %s20, 1
        %s304 = smul.addr %s303, 16
        %s305 = smul.addr %s304, 4
        %s306 = scalar_lea.vmem %s0, %s305
        %p307 = pneg %p41
        %p308 = pneg %p38
        %p309 = pneg %p62
        %p310 = pneg %p59
        %p311 = pneg %p83
        %p312 = pneg %p80
        %p313 = pneg %p104
        %p314 = pneg %p101
        %p315 = pneg %p125
        %p316 = pneg %p122
        %p317 = pneg %p146
        %p318 = pneg %p143
        %p319 = pneg %p167
        %p320 = pneg %p164
        %p321 = pneg %p188
        %p322 = pneg %p185
        %p323 = scmp.lt.s32.totalorder %s20, 1
        %s324 = scalar_select %p323, %s20, 1
        %s325 = smul.addr %s324, 8
        %s326 = scalar_lea.vmem %s8, %s325
        %p327 = pneg %p214
        %p328 = pneg %p211
        %p329 = pneg %p240
        %p330 = pneg %p237
        %s331 = sand.u32 %s227, 1
        %s332 = sand.u32 %s227, 1
        %s333 = smul.addr %s332, 128
        %s334 = scalar_lea.vmem [#allocation4], %s333
        %p335 = scmp.lt.s32.totalorder %s20, 1
        %s336 = scalar_select %p335, %s20, 1
        %s337 = smul.addr %s336, 16
        %s338 = smul.addr %s337, 4
        %s339 = scalar_lea.vmem %s0, %s338
        %p340 = scmp.lt.s32.totalorder %s20, 1
        %s341 = scalar_select %p340, %s20, 1
        %s342 = smul.addr %s341, 8
        %s343 = scalar_lea.vmem %s8, %s342
        %v345 = vld [vmem:[%s339] sm:$0xf]
        %v346 = vld [vmem:[%s339 + $0x4] sm:$0xf]
        %v347 = vld [vmem:[%s339 + $0x8] sm:$0xf]
        %v348 = vld [vmem:[%s339 + $0xc] sm:$0xf]
        %v349 = vld [vmem:[%s339 + $0x10] sm:$0xf]
        %v350 = vld [vmem:[%s339 + $0x14] sm:$0xf]
        %v351 = vld [vmem:[%s339 + $0x18] sm:$0xf]
        %v352 = vld [vmem:[%s339 + $0x1c] sm:$0xf]
        %v353 = vld [vmem:[%s339 + $0x20] sm:$0xf]
        %v354 = vld [vmem:[%s339 + $0x24] sm:$0xf]
        %v355 = vld [vmem:[%s339 + $0x28] sm:$0xf]
        %v356 = vld [vmem:[%s339 + $0x2c] sm:$0xf]
        %v357 = vld [vmem:[%s339 + $0x30] sm:$0xf]
        %v358 = vld [vmem:[%s339 + $0x34] sm:$0xf]
        %v359 = vld [vmem:[%s339 + $0x38] sm:$0xf]
        %v360 = vld [vmem:[%s339 + $0x3c] sm:$0xf]
        %v361 = vld [vmem:[%s1] sm:$0xf]
        %v362 = vld [vmem:[%s2] sm:$0x1]
        %v364 = vlaneseq
        %v365 = vshrl.u32 %v364, 7
        %v366 = vsub.s32 0, %v365
        %v367 = vrot.slane %v362, %v366
        %v385 = vunpack.c.l.b16 %v345
        %v386 = vunpack.c.l.b16 %v346
        %v387 = vunpack.c.l.b16 %v347
        %v388 = vunpack.c.l.b16 %v348
        %v389 = vunpack.c.l.b16 %v349
        %v390 = vunpack.c.l.b16 %v350
        %v391 = vunpack.c.l.b16 %v351
        %v392 = vunpack.c.l.b16 %v352
        %v393 = vunpack.c.l.b16 %v353
        %v394 = vunpack.c.l.b16 %v354
        %v395 = vunpack.c.l.b16 %v355
        %v396 = vunpack.c.l.b16 %v356
        %v397 = vunpack.c.l.b16 %v357
        %v398 = vunpack.c.l.b16 %v358
        %v399 = vunpack.c.l.b16 %v359
        %v400 = vunpack.c.l.b16 %v360
        %v401 = vpack.c.b16 %v386, %v385
        %v402 = vpack.c.b16 %v388, %v387
        %v403 = vpack.c.b16 %v390, %v389
        %v404 = vpack.c.b16 %v392, %v391
        %v405 = vpack.c.b16 %v394, %v393
        %v406 = vpack.c.b16 %v396, %v395
        %v407 = vpack.c.b16 %v398, %v397
        %v408 = vpack.c.b16 %v400, %v399
        %vm409 = vcmask 64512
        %v411 = vsel %vm409, %v401, 0
        %v414 = vsel %vm409, %v402, 0
        %v417 = vsel %vm409, %v403, 0
        %v420 = vsel %vm409, %v404, 0
        %v423 = vsel %vm409, %v405, 0
        %v426 = vsel %vm409, %v406, 0
        %v429 = vsel %vm409, %v407, 0
        %v432 = vsel %vm409, %v408, 0
        %vm434 = vcmask 1043456
        %v436 = vsel %vm434, %v361, 0
        %438 = vmatprep.subr.bf16.mxu0 0
        %439 = vmatpush1.bf16.msra.mxu0 0
        %440 = vmatprep.subr.bf16.mxu0 0
        %441 = vmatpush1.bf16.msra.mxu0 0
        %442 = vmatprep.subr.bf16.mxu0 0
        %443 = vmatpush1.bf16.msra.mxu0 0
        %444 = vmatprep.subr.bf16.mxu0 0
        %445 = vmatpush1.bf16.msra.mxu0 0
        %446 = vmatprep.subr.bf16.mxu0 0
        %447 = vmatpush1.bf16.msra.mxu0 0
        %448 = vmatprep.subr.bf16.mxu0 0
        %449 = vmatpush1.bf16.msra.mxu0 0
        %450 = vmatprep.subr.bf16.mxu0 0
        %451 = vmatpush1.bf16.msra.mxu0 0
        %452 = vmatprep.subr.bf16.mxu0 0
        %453 = vmatpush1.bf16.msra.mxu0 %v436
        %454 = vmatprep.subr.bf16.mxu0 0
        %455 = vmatpush2.bf16.msra.mxu0 0
        %456 = vmatprep.subr.bf16.mxu0 0
        %457 = vmatpush2.bf16.msra.mxu0 0
        %458 = vmatprep.subr.bf16.mxu0 0
        %459 = vmatpush2.bf16.msra.mxu0 0
        %460 = vmatprep.subr.bf16.mxu0 0
        %461 = vmatpush2.bf16.msra.mxu0 0
        %462 = vmatprep.subr.bf16.mxu0 0
        %463 = vmatpush2.bf16.msra.mxu0 0
        %464 = vmatprep.subr.bf16.mxu0 0
        %465 = vmatpush2.bf16.msra.mxu0 0
        %466 = vmatprep.subr.bf16.mxu0 0
        %467 = vmatpush2.bf16.msra.mxu0 0
        %468 = vmatprep.subr.bf16.mxu0 0
        %469 = vmatpush2.bf16.msra.mxu0 0
        %470 = vmatprep.mubr.bf16.mxu0 0
        %471 = vmatmul.mubr.bf16.gmra.mxu0 %v411
        %v472 = vpop.f32.mrf.mxu0
        %v473 = vadd.f32 %v367, %v472
        %v474 = vpop.f32.mrf.mxu0
        %v475 = vpop.f32.mrf.mxu0
        %v476 = vadd.f32 %v367, %v475
        %v477 = vpop.f32.mrf.mxu0
        %478 = vmatprep.mubr.bf16.mxu0 0
        %479 = vmatmul.mubr.bf16.gmra.mxu0 %v414
        %v480 = vpop.f32.mrf.mxu0
        %v481 = vadd.f32 %v367, %v480
        %v482 = vpop.f32.mrf.mxu0
        %v483 = vpop.f32.mrf.mxu0
        %v484 = vadd.f32 %v367, %v483
        %v485 = vpop.f32.mrf.mxu0
        %486 = vmatprep.mubr.bf16.mxu0 0
        %487 = vmatmul.mubr.bf16.gmra.mxu0 %v417
        %v488 = vpop.f32.mrf.mxu0
        %v489 = vadd.f32 %v367, %v488
        %v490 = vpop.f32.mrf.mxu0
        %v491 = vpop.f32.mrf.mxu0
        %v492 = vadd.f32 %v367, %v491
        %v493 = vpop.f32.mrf.mxu0
        %494 = vmatprep.mubr.bf16.mxu0 0
        %495 = vmatmul.mubr.bf16.gmra.mxu0 %v420
        %v496 = vpop.f32.mrf.mxu0
        %v497 = vadd.f32 %v367, %v496
        %v498 = vpop.f32.mrf.mxu0
        %v499 = vpop.f32.mrf.mxu0
        %v500 = vadd.f32 %v367, %v499
        %v501 = vpop.f32.mrf.mxu0
        %502 = vmatprep.mubr.bf16.mxu0 0
        %503 = vmatmul.mubr.bf16.gmra.mxu0 %v423
        %v504 = vpop.f32.mrf.mxu0
        %v505 = vadd.f32 %v367, %v504
        %v506 = vpop.f32.mrf.mxu0
        %v507 = vpop.f32.mrf.mxu0
        %v508 = vadd.f32 %v367, %v507
        %v509 = vpop.f32.mrf.mxu0
        %510 = vmatprep.mubr.bf16.mxu0 0
        %511 = vmatmul.mubr.bf16.gmra.mxu0 %v426
        %v512 = vpop.f32.mrf.mxu0
        %v513 = vadd.f32 %v367, %v512
        %v514 = vpop.f32.mrf.mxu0
        %v515 = vpop.f32.mrf.mxu0
        %v516 = vadd.f32 %v367, %v515
        %v517 = vpop.f32.mrf.mxu0
        %518 = vmatprep.mubr.bf16.mxu0 0
        %519 = vmatmul.mubr.bf16.gmra.mxu0 %v429
        %v520 = vpop.f32.mrf.mxu0
        %v521 = vadd.f32 %v367, %v520
        %v522 = vpop.f32.mrf.mxu0
        %v523 = vpop.f32.mrf.mxu0
        %v524 = vadd.f32 %v367, %v523
        %v525 = vpop.f32.mrf.mxu0
        %526 = vmatprep.mubr.bf16.mxu0 0
        %527 = vmatmul.mubr.bf16.gmra.mxu0 %v432
        %v528 = vpop.f32.mrf.mxu0
        %v529 = vadd.f32 %v367, %v528
        %v530 = vpop.f32.mrf.mxu0
        %v531 = vpop.f32.mrf.mxu0
        %v532 = vadd.f32 %v367, %v531
        %v533 = vpop.f32.mrf.mxu0
        %534 = vdwg.mxu0
        %vm535 = vcmask 130048
        %536 = vst.msk [vmem:[#allocation2] sm:$0xff] %vm535, %v473
        %537 = vst.msk [vmem:[#allocation2 + $0x8] sm:$0xff] %vm535, %v476
        %538 = vst.msk [vmem:[#allocation2 + $0x10] sm:$0xff] %vm535, %v481
        %539 = vst.msk [vmem:[#allocation2 + $0x18] sm:$0xff] %vm535, %v484
        %540 = vst.msk [vmem:[#allocation2 + $0x20] sm:$0xff] %vm535, %v489
        %541 = vst.msk [vmem:[#allocation2 + $0x28] sm:$0xff] %vm535, %v492
        %542 = vst.msk [vmem:[#allocation2 + $0x30] sm:$0xff] %vm535, %v497
        %543 = vst.msk [vmem:[#allocation2 + $0x38] sm:$0xff] %vm535, %v500
        %544 = vst.msk [vmem:[#allocation2 + $0x40] sm:$0xff] %vm535, %v505
        %545 = vst.msk [vmem:[#allocation2 + $0x48] sm:$0xff] %vm535, %v508
        %546 = vst.msk [vmem:[#allocation2 + $0x50] sm:$0xff] %vm535, %v513
        %547 = vst.msk [vmem:[#allocation2 + $0x58] sm:$0xff] %vm535, %v516
        %548 = vst.msk [vmem:[#allocation2 + $0x60] sm:$0xff] %vm535, %v521
        %549 = vst.msk [vmem:[#allocation2 + $0x68] sm:$0xff] %vm535, %v524
        %550 = vst.msk [vmem:[#allocation2 + $0x70] sm:$0xff] %vm535, %v529
        %551 = vst.msk [vmem:[#allocation2 + $0x78] sm:$0xff] %vm535, %v532
        %s552 = scalar_lea.vmem %s1, 4
        %v553 = vld [vmem:[%s552] sm:$0xf]
        %s554 = scalar_lea.vmem %s2, 1
        %v555 = vld [vmem:[%s554] sm:$0x1]
        %v557 = vlaneseq
        %v558 = vshrl.u32 %v557, 7
        %v559 = vsub.s32 0, %v558
        %v560 = vrot.slane %v555, %v559
        %v563 = vsel %vm434, %v553, 0
        %565 = vmatprep.subr.bf16.mxu0 0
        %566 = vmatpush1.bf16.msra.mxu0 0
        %567 = vmatprep.subr.bf16.mxu0 0
        %568 = vmatpush1.bf16.msra.mxu0 0
        %569 = vmatprep.subr.bf16.mxu0 0
        %570 = vmatpush1.bf16.msra.mxu0 0
        %571 = vmatprep.subr.bf16.mxu0 0
        %572 = vmatpush1.bf16.msra.mxu0 0
        %573 = vmatprep.subr.bf16.mxu0 0
        %574 = vmatpush1.bf16.msra.mxu0 0
        %575 = vmatprep.subr.bf16.mxu0 0
        %576 = vmatpush1.bf16.msra.mxu0 0
        %577 = vmatprep.subr.bf16.mxu0 0
        %578 = vmatpush1.bf16.msra.mxu0 0
        %579 = vmatprep.subr.bf16.mxu0 0
        %580 = vmatpush1.bf16.msra.mxu0 %v563
        %581 = vmatprep.subr.bf16.mxu0 0
        %582 = vmatpush2.bf16.msra.mxu0 0
        %583 = vmatprep.subr.bf16.mxu0 0
        %584 = vmatpush2.bf16.msra.mxu0 0
        %585 = vmatprep.subr.bf16.mxu0 0
        %586 = vmatpush2.bf16.msra.mxu0 0
        %587 = vmatprep.subr.bf16.mxu0 0
        %588 = vmatpush2.bf16.msra.mxu0 0
        %589 = vmatprep.subr.bf16.mxu0 0
        %590 = vmatpush2.bf16.msra.mxu0 0
        %591 = vmatprep.subr.bf16.mxu0 0
        %592 = vmatpush2.bf16.msra.mxu0 0
        %593 = vmatprep.subr.bf16.mxu0 0
        %594 = vmatpush2.bf16.msra.mxu0 0
        %595 = vmatprep.subr.bf16.mxu0 0
        %596 = vmatpush2.bf16.msra.mxu0 0
        %597 = vmatprep.mubr.bf16.mxu0 0
        %598 = vmatmul.mubr.bf16.gmra.mxu0 %v411
        %v599 = vpop.f32.mrf.mxu0
        %v600 = vadd.f32 %v560, %v599
        %v601 = vpop.f32.mrf.mxu0
        %v602 = vpop.f32.mrf.mxu0
        %v603 = vadd.f32 %v560, %v602
        %v604 = vpop.f32.mrf.mxu0
        %605 = vmatprep.mubr.bf16.mxu0 0
        %606 = vmatmul.mubr.bf16.gmra.mxu0 %v414
        %v607 = vpop.f32.mrf.mxu0
        %v608 = vadd.f32 %v560, %v607
        %v609 = vpop.f32.mrf.mxu0
        %v610 = vpop.f32.mrf.mxu0
        %v611 = vadd.f32 %v560, %v610
        %v612 = vpop.f32.mrf.mxu0
        %613 = vmatprep.mubr.bf16.mxu0 0
        %614 = vmatmul.mubr.bf16.gmra.mxu0 %v417
        %v615 = vpop.f32.mrf.mxu0
        %v616 = vadd.f32 %v560, %v615
        %v617 = vpop.f32.mrf.mxu0
        %v618 = vpop.f32.mrf.mxu0
        %v619 = vadd.f32 %v560, %v618
        %v620 = vpop.f32.mrf.mxu0
        %621 = vmatprep.mubr.bf16.mxu0 0
        %622 = vmatmul.mubr.bf16.gmra.mxu0 %v420
        %v623 = vpop.f32.mrf.mxu0
        %v624 = vadd.f32 %v560, %v623
        %v625 = vpop.f32.mrf.mxu0
        %v626 = vpop.f32.mrf.mxu0
        %v627 = vadd.f32 %v560, %v626
        %v628 = vpop.f32.mrf.mxu0
        %629 = vmatprep.mubr.bf16.mxu0 0
        %630 = vmatmul.mubr.bf16.gmra.mxu0 %v423
        %v631 = vpop.f32.mrf.mxu0
        %v632 = vadd.f32 %v560, %v631
        %v633 = vpop.f32.mrf.mxu0
        %v634 = vpop.f32.mrf.mxu0
        %v635 = vadd.f32 %v560, %v634
        %v636 = vpop.f32.mrf.mxu0
        %637 = vmatprep.mubr.bf16.mxu0 0
        %638 = vmatmul.mubr.bf16.gmra.mxu0 %v426
        %v639 = vpop.f32.mrf.mxu0
        %v640 = vadd.f32 %v560, %v639
        %v641 = vpop.f32.mrf.mxu0
        %v642 = vpop.f32.mrf.mxu0
        %v643 = vadd.f32 %v560, %v642
        %v644 = vpop.f32.mrf.mxu0
        %645 = vmatprep.mubr.bf16.mxu0 0
        %646 = vmatmul.mubr.bf16.gmra.mxu0 %v429
        %v647 = vpop.f32.mrf.mxu0
        %v648 = vadd.f32 %v560, %v647
        %v649 = vpop.f32.mrf.mxu0
        %v650 = vpop.f32.mrf.mxu0
        %v651 = vadd.f32 %v560, %v650
        %v652 = vpop.f32.mrf.mxu0
        %653 = vmatprep.mubr.bf16.mxu0 0
        %654 = vmatmul.mubr.bf16.gmra.mxu0 %v432
        %v655 = vpop.f32.mrf.mxu0
        %v656 = vadd.f32 %v560, %v655
        %v657 = vpop.f32.mrf.mxu0
        %v658 = vpop.f32.mrf.mxu0
        %v659 = vadd.f32 %v560, %v658
        %v660 = vpop.f32.mrf.mxu0
        %661 = vdwg.mxu0
        %s662 = scalar_lea.vmem [#allocation2], 128
        %663 = vst.msk [vmem:[%s662] sm:$0xff] %vm535, %v600
        %664 = vst.msk [vmem:[%s662 + $0x8] sm:$0xff] %vm535, %v603
        %665 = vst.msk [vmem:[%s662 + $0x10] sm:$0xff] %vm535, %v608
        %666 = vst.msk [vmem:[%s662 + $0x18] sm:$0xff] %vm535, %v611
        %667 = vst.msk [vmem:[%s662 + $0x20] sm:$0xff] %vm535, %v616
        %668 = vst.msk [vmem:[%s662 + $0x28] sm:$0xff] %vm535, %v619
        %669 = vst.msk [vmem:[%s662 + $0x30] sm:$0xff] %vm535, %v624
        %670 = vst.msk [vmem:[%s662 + $0x38] sm:$0xff] %vm535, %v627
        %671 = vst.msk [vmem:[%s662 + $0x40] sm:$0xff] %vm535, %v632
        %672 = vst.msk [vmem:[%s662 + $0x48] sm:$0xff] %vm535, %v635
        %673 = vst.msk [vmem:[%s662 + $0x50] sm:$0xff] %vm535, %v640
        %674 = vst.msk [vmem:[%s662 + $0x58] sm:$0xff] %vm535, %v643
        %675 = vst.msk [vmem:[%s662 + $0x60] sm:$0xff] %vm535, %v648
        %676 = vst.msk [vmem:[%s662 + $0x68] sm:$0xff] %vm535, %v651
        %677 = vst.msk [vmem:[%s662 + $0x70] sm:$0xff] %vm535, %v656
        %678 = vst.msk [vmem:[%s662 + $0x78] sm:$0xff] %vm535, %v659
        %s679 = scalar_lea.vmem %s1, 8
        %v680 = vld [vmem:[%s679] sm:$0xf]
        %s681 = scalar_lea.vmem %s2, 2
        %v682 = vld [vmem:[%s681] sm:$0x1]
        %v684 = vlaneseq
        %v685 = vshrl.u32 %v684, 7
        %v686 = vsub.s32 0, %v685
        %v687 = vrot.slane %v682, %v686
        %v690 = vsel %vm434, %v680, 0
        %692 = vmatprep.subr.bf16.mxu0 0
        %693 = vmatpush1.bf16.msra.mxu0 0
        %694 = vmatprep.subr.bf16.mxu0 0
        %695 = vmatpush1.bf16.msra.mxu0 0
        %696 = vmatprep.subr.bf16.mxu0 0
        %697 = vmatpush1.bf16.msra.mxu0 0
        %698 = vmatprep.subr.bf16.mxu0 0
        %699 = vmatpush1.bf16.msra.mxu0 0
        %700 = vmatprep.subr.bf16.mxu0 0
        %701 = vmatpush1.bf16.msra.mxu0 0
        %702 = vmatprep.subr.bf16.mxu0 0
        %703 = vmatpush1.bf16.msra.mxu0 0
        %704 = vmatprep.subr.bf16.mxu0 0
        %705 = vmatpush1.bf16.msra.mxu0 0
        %706 = vmatprep.subr.bf16.mxu0 0
        %707 = vmatpush1.bf16.msra.mxu0 %v690
        %708 = vmatprep.subr.bf16.mxu0 0
        %709 = vmatpush2.bf16.msra.mxu0 0
        %710 = vmatprep.subr.bf16.mxu0 0
        %711 = vmatpush2.bf16.msra.mxu0 0
        %712 = vmatprep.subr.bf16.mxu0 0
        %713 = vmatpush2.bf16.msra.mxu0 0
        %714 = vmatprep.subr.bf16.mxu0 0
        %715 = vmatpush2.bf16.msra.mxu0 0
        %716 = vmatprep.subr.bf16.mxu0 0
        %717 = vmatpush2.bf16.msra.mxu0 0
        %718 = vmatprep.subr.bf16.mxu0 0
        %719 = vmatpush2.bf16.msra.mxu0 0
        %720 = vmatprep.subr.bf16.mxu0 0
        %721 = vmatpush2.bf16.msra.mxu0 0
        %722 = vmatprep.subr.bf16.mxu0 0
        %723 = vmatpush2.bf16.msra.mxu0 0
        %724 = vmatprep.mubr.bf16.mxu0 0
        %725 = vmatmul.mubr.bf16.gmra.mxu0 %v411
        %v726 = vpop.f32.mrf.mxu0
        %v727 = vadd.f32 %v687, %v726
        %v728 = vpop.f32.mrf.mxu0
        %v729 = vpop.f32.mrf.mxu0
        %v730 = vadd.f32 %v687, %v729
        %v731 = vpop.f32.mrf.mxu0
        %732 = vmatprep.mubr.bf16.mxu0 0
        %733 = vmatmul.mubr.bf16.gmra.mxu0 %v414
        %v734 = vpop.f32.mrf.mxu0
        %v735 = vadd.f32 %v687, %v734
        %v736 = vpop.f32.mrf.mxu0
        %v737 = vpop.f32.mrf.mxu0
        %v738 = vadd.f32 %v687, %v737
        %v739 = vpop.f32.mrf.mxu0
        %740 = vmatprep.mubr.bf16.mxu0 0
        %741 = vmatmul.mubr.bf16.gmra.mxu0 %v417
        %v742 = vpop.f32.mrf.mxu0
        %v743 = vadd.f32 %v687, %v742
        %v744 = vpop.f32.mrf.mxu0
        %v745 = vpop.f32.mrf.mxu0
        %v746 = vadd.f32 %v687, %v745
        %v747 = vpop.f32.mrf.mxu0
        %748 = vmatprep.mubr.bf16.mxu0 0
        %749 = vmatmul.mubr.bf16.gmra.mxu0 %v420
        %v750 = vpop.f32.mrf.mxu0
        %v751 = vadd.f32 %v687, %v750
        %v752 = vpop.f32.mrf.mxu0
        %v753 = vpop.f32.mrf.mxu0
        %v754 = vadd.f32 %v687, %v753
        %v755 = vpop.f32.mrf.mxu0
        %756 = vmatprep.mubr.bf16.mxu0 0
        %757 = vmatmul.mubr.bf16.gmra.mxu0 %v423
        %v758 = vpop.f32.mrf.mxu0
        %v759 = vadd.f32 %v687, %v758
        %v760 = vpop.f32.mrf.mxu0
        %v761 = vpop.f32.mrf.mxu0
        %v762 = vadd.f32 %v687, %v761
        %v763 = vpop.f32.mrf.mxu0
        %764 = vmatprep.mubr.bf16.mxu0 0
        %765 = vmatmul.mubr.bf16.gmra.mxu0 %v426
        %v766 = vpop.f32.mrf.mxu0
        %v767 = vadd.f32 %v687, %v766
        %v768 = vpop.f32.mrf.mxu0
        %v769 = vpop.f32.mrf.mxu0
        %v770 = vadd.f32 %v687, %v769
        %v771 = vpop.f32.mrf.mxu0
        %772 = vmatprep.mubr.bf16.mxu0 0
        %773 = vmatmul.mubr.bf16.gmra.mxu0 %v429
        %v774 = vpop.f32.mrf.mxu0
        %v775 = vadd.f32 %v687, %v774
        %v776 = vpop.f32.mrf.mxu0
        %v777 = vpop.f32.mrf.mxu0
        %v778 = vadd.f32 %v687, %v777
        %v779 = vpop.f32.mrf.mxu0
        %780 = vmatprep.mubr.bf16.mxu0 0
        %781 = vmatmul.mubr.bf16.gmra.mxu0 %v432
        %v782 = vpop.f32.mrf.mxu0
        %v783 = vadd.f32 %v687, %v782
        %v784 = vpop.f32.mrf.mxu0
        %v785 = vpop.f32.mrf.mxu0
        %v786 = vadd.f32 %v687, %v785
        %v787 = vpop.f32.mrf.mxu0
        %788 = vdwg.mxu0
        %s789 = scalar_lea.vmem [#allocation2], 256
        %790 = vst.msk [vmem:[%s789] sm:$0xff] %vm535, %v727
        %791 = vst.msk [vmem:[%s789 + $0x8] sm:$0xff] %vm535, %v730
        %792 = vst.msk [vmem:[%s789 + $0x10] sm:$0xff] %vm535, %v735
        %793 = vst.msk [vmem:[%s789 + $0x18] sm:$0xff] %vm535, %v738
        %794 = vst.msk [vmem:[%s789 + $0x20] sm:$0xff] %vm535, %v743
        %795 = vst.msk [vmem:[%s789 + $0x28] sm:$0xff] %vm535, %v746
        %796 = vst.msk [vmem:[%s789 + $0x30] sm:$0xff] %vm535, %v751
        %797 = vst.msk [vmem:[%s789 + $0x38] sm:$0xff] %vm535, %v754
        %798 = vst.msk [vmem:[%s789 + $0x40] sm:$0xff] %vm535, %v759
        %799 = vst.msk [vmem:[%s789 + $0x48] sm:$0xff] %vm535, %v762
        %800 = vst.msk [vmem:[%s789 + $0x50] sm:$0xff] %vm535, %v767
        %801 = vst.msk [vmem:[%s789 + $0x58] sm:$0xff] %vm535, %v770
        %802 = vst.msk [vmem:[%s789 + $0x60] sm:$0xff] %vm535, %v775
        %803 = vst.msk [vmem:[%s789 + $0x68] sm:$0xff] %vm535, %v778
        %804 = vst.msk [vmem:[%s789 + $0x70] sm:$0xff] %vm535, %v783
        %805 = vst.msk [vmem:[%s789 + $0x78] sm:$0xff] %vm535, %v786
        %s806 = scalar_lea.vmem %s1, 12
        %v807 = vld [vmem:[%s806] sm:$0xf]
        %s808 = scalar_lea.vmem %s2, 3
        %v809 = vld [vmem:[%s808] sm:$0x1]
        %v811 = vlaneseq
        %v812 = vshrl.u32 %v811, 7
        %v813 = vsub.s32 0, %v812
        %v814 = vrot.slane %v809, %v813
        %v817 = vsel %vm434, %v807, 0
        %819 = vmatprep.subr.bf16.mxu0 0
        %820 = vmatpush1.bf16.msra.mxu0 0
        %821 = vmatprep.subr.bf16.mxu0 0
        %822 = vmatpush1.bf16.msra.mxu0 0
        %823 = vmatprep.subr.bf16.mxu0 0
        %824 = vmatpush1.bf16.msra.mxu0 0
        %825 = vmatprep.subr.bf16.mxu0 0
        %826 = vmatpush1.bf16.msra.mxu0 0
        %827 = vmatprep.subr.bf16.mxu0 0
        %828 = vmatpush1.bf16.msra.mxu0 0
        %829 = vmatprep.subr.bf16.mxu0 0
        %830 = vmatpush1.bf16.msra.mxu0 0
        %831 = vmatprep.subr.bf16.mxu0 0
        %832 = vmatpush1.bf16.msra.mxu0 0
        %833 = vmatprep.subr.bf16.mxu0 0
        %834 = vmatpush1.bf16.msra.mxu0 %v817
        %835 = vmatprep.subr.bf16.mxu0 0
        %836 = vmatpush2.bf16.msra.mxu0 0
        %837 = vmatprep.subr.bf16.mxu0 0
        %838 = vmatpush2.bf16.msra.mxu0 0
        %839 = vmatprep.subr.bf16.mxu0 0
        %840 = vmatpush2.bf16.msra.mxu0 0
        %841 = vmatprep.subr.bf16.mxu0 0
        %842 = vmatpush2.bf16.msra.mxu0 0
        %843 = vmatprep.subr.bf16.mxu0 0
        %844 = vmatpush2.bf16.msra.mxu0 0
        %845 = vmatprep.subr.bf16.mxu0 0
        %846 = vmatpush2.bf16.msra.mxu0 0
        %847 = vmatprep.subr.bf16.mxu0 0
        %848 = vmatpush2.bf16.msra.mxu0 0
        %849 = vmatprep.subr.bf16.mxu0 0
        %850 = vmatpush2.bf16.msra.mxu0 0
        %851 = vmatprep.mubr.bf16.mxu0 0
        %852 = vmatmul.mubr.bf16.gmra.mxu0 %v411
        %v853 = vpop.f32.mrf.mxu0
        %v854 = vadd.f32 %v814, %v853
        %v855 = vpop.f32.mrf.mxu0
        %v856 = vpop.f32.mrf.mxu0
        %v857 = vadd.f32 %v814, %v856
        %v858 = vpop.f32.mrf.mxu0
        %859 = vmatprep.mubr.bf16.mxu0 0
        %860 = vmatmul.mubr.bf16.gmra.mxu0 %v414
        %v861 = vpop.f32.mrf.mxu0
        %v862 = vadd.f32 %v814, %v861
        %v863 = vpop.f32.mrf.mxu0
        %v864 = vpop.f32.mrf.mxu0
        %v865 = vadd.f32 %v814, %v864
        %v866 = vpop.f32.mrf.mxu0
        %867 = vmatprep.mubr.bf16.mxu0 0
        %868 = vmatmul.mubr.bf16.gmra.mxu0 %v417
        %v869 = vpop.f32.mrf.mxu0
        %v870 = vadd.f32 %v814, %v869
        %v871 = vpop.f32.mrf.mxu0
        %v872 = vpop.f32.mrf.mxu0
        %v873 = vadd.f32 %v814, %v872
        %v874 = vpop.f32.mrf.mxu0
        %875 = vmatprep.mubr.bf16.mxu0 0
        %876 = vmatmul.mubr.bf16.gmra.mxu0 %v420
        %v877 = vpop.f32.mrf.mxu0
        %v878 = vadd.f32 %v814, %v877
        %v879 = vpop.f32.mrf.mxu0
        %v880 = vpop.f32.mrf.mxu0
        %v881 = vadd.f32 %v814, %v880
        %v882 = vpop.f32.mrf.mxu0
        %883 = vmatprep.mubr.bf16.mxu0 0
        %884 = vmatmul.mubr.bf16.gmra.mxu0 %v423
        %v885 = vpop.f32.mrf.mxu0
        %v886 = vadd.f32 %v814, %v885
        %v887 = vpop.f32.mrf.mxu0
        %v888 = vpop.f32.mrf.mxu0
        %v889 = vadd.f32 %v814, %v888
        %v890 = vpop.f32.mrf.mxu0
        %891 = vmatprep.mubr.bf16.mxu0 0
        %892 = vmatmul.mubr.bf16.gmra.mxu0 %v426
        %v893 = vpop.f32.mrf.mxu0
        %v894 = vadd.f32 %v814, %v893
        %v895 = vpop.f32.mrf.mxu0
        %v896 = vpop.f32.mrf.mxu0
        %v897 = vadd.f32 %v814, %v896
        %v898 = vpop.f32.mrf.mxu0
        %899 = vmatprep.mubr.bf16.mxu0 0
        %900 = vmatmul.mubr.bf16.gmra.mxu0 %v429
        %v901 = vpop.f32.mrf.mxu0
        %v902 = vadd.f32 %v814, %v901
        %v903 = vpop.f32.mrf.mxu0
        %v904 = vpop.f32.mrf.mxu0
        %v905 = vadd.f32 %v814, %v904
        %v906 = vpop.f32.mrf.mxu0
        %907 = vmatprep.mubr.bf16.mxu0 0
        %908 = vmatmul.mubr.bf16.gmra.mxu0 %v432
        %v909 = vpop.f32.mrf.mxu0
        %v910 = vadd.f32 %v814, %v909
        %v911 = vpop.f32.mrf.mxu0
        %v912 = vpop.f32.mrf.mxu0
        %v913 = vadd.f32 %v814, %v912
        %v914 = vpop.f32.mrf.mxu0
        %915 = vdwg.mxu0
        %s916 = scalar_lea.vmem [#allocation2], 384
        %917 = vst.msk [vmem:[%s916] sm:$0xff] %vm535, %v854
        %918 = vst.msk [vmem:[%s916 + $0x8] sm:$0xff] %vm535, %v857
        %919 = vst.msk [vmem:[%s916 + $0x10] sm:$0xff] %vm535, %v862
        %920 = vst.msk [vmem:[%s916 + $0x18] sm:$0xff] %vm535, %v865
        %921 = vst.msk [vmem:[%s916 + $0x20] sm:$0xff] %vm535, %v870
        %922 = vst.msk [vmem:[%s916 + $0x28] sm:$0xff] %vm535, %v873
        %923 = vst.msk [vmem:[%s916 + $0x30] sm:$0xff] %vm535, %v878
        %924 = vst.msk [vmem:[%s916 + $0x38] sm:$0xff] %vm535, %v881
        %925 = vst.msk [vmem:[%s916 + $0x40] sm:$0xff] %vm535, %v886
        %926 = vst.msk [vmem:[%s916 + $0x48] sm:$0xff] %vm535, %v889
        %927 = vst.msk [vmem:[%s916 + $0x50] sm:$0xff] %vm535, %v894
        %928 = vst.msk [vmem:[%s916 + $0x58] sm:$0xff] %vm535, %v897
        %929 = vst.msk [vmem:[%s916 + $0x60] sm:$0xff] %vm535, %v902
        %930 = vst.msk [vmem:[%s916 + $0x68] sm:$0xff] %vm535, %v905
        %931 = vst.msk [vmem:[%s916 + $0x70] sm:$0xff] %vm535, %v910
        %932 = vst.msk [vmem:[%s916 + $0x78] sm:$0xff] %vm535, %v913
        %v933 = vld [vmem:[%s3] sm:$0x1]
        %v934 = vld [vmem:[%s3 + $0x1] sm:$0x1]
        %v935 = vld [vmem:[%s3 + $0x2] sm:$0x1]
        %v936 = vld [vmem:[%s3 + $0x3] sm:$0x1]
        %v941 = vlaneseq
        %v942 = vshrl.u32 %v941, 7
        %v943 = vsub.s32 0, %v942
        %v944 = vrot.slane %v933, %v943
        %v945 = vlaneseq
        %v946 = vshrl.u32 %v945, 7
        %v947 = vsub.s32 0, %v946
        %v948 = vrot.slane %v934, %v947
        %v949 = vlaneseq
        %v950 = vshrl.u32 %v949, 7
        %v951 = vsub.s32 0, %v950
        %v952 = vrot.slane %v935, %v951
        %v953 = vlaneseq
        %v954 = vshrl.u32 %v953, 7
        %v955 = vsub.s32 0, %v954
        %v956 = vrot.slane %v936, %v955
        %v961 = vld [vmem:[%s4] sm:$0x1]
        %v963 = vlaneseq
        %v964 = vshrl.u32 %v963, 7
        %v965 = vsub.s32 0, %v964
        %v966 = vrot.slane %v961, %v965
        %v968 = vld [vmem:[%s7] sm:$0x1]
        %v970 = vlaneseq
        %v971 = vshrl.u32 %v970, 7
        %v972 = vsub.s32 0, %v971
        %v973 = vrot.slane %v968, %v972
        %v975 = vld [vmem:[%s343] sm:$0xff]
        loop: start=0, step=1, limit=16
        $region57: #{tpu_custom_call.1} parent=55 // loop_pre_header
          _
        $region58: #{tpu_custom_call.1} parent=55 // loop_header
          %s977 = sphi 0, %s981
          %p978 = scmp.ge.s32.totalorder %s977, 16
          %v982 = vphi %v975, %v1007
          %v983 = vphi 0.0, %v1010
          %v984 = vphi 0.0, %v998
          %v985 = vphi 0.0, %v999
          %v986 = vphi 0.0, %v1000
          %v987 = vphi 0.0, %v1001
        $region59: #{tpu_custom_call.1} parent=55 // loop_header_branch
          %980 = sbr.rel (%p978) target = $region63
        $region60: #{tpu_custom_call.1} parent=55 // loop_body
          %s988 = smul.u32 %s977, 8
          %s989 = scalar_lea.vmem [#allocation2], %s988
          %v990 = vld [vmem:[%s989] sm:$0xff]
          %v991 = vld [vmem:[%s989 + $0x80] sm:$0xff]
          %v992 = vld [vmem:[%s989 + $0x100] sm:$0xff]
          %v993 = vld [vmem:[%s989 + $0x180] sm:$0xff]
          %v994 = vmul.f32 %v944, %v984
          %v995 = vmul.f32 %v948, %v985
          %v996 = vmul.f32 %v952, %v986
          %v997 = vmul.f32 %v956, %v987
          %v998 = vadd.f32 %v994, %v990
          %v999 = vadd.f32 %v995, %v991
          %v1000 = vadd.f32 %v996, %v992
          %v1001 = vadd.f32 %v997, %v993
          %v1002 = vadd.f32 %v998, %v999
          %v1003 = vadd.f32 %v1002, %v1000
          %v1004 = vadd.f32 %v1003, %v1001
          %v1005 = vmul.f32 %v982, %v966
          %v1006 = vadd.f32 %v1005, %v1004
          %v1007 = vsub.f32 %v1006, %v983
          %vm1008 = vcmp.gt.f32.partialorder %v1007, 1.0
          %v1009 = vsel %vm1008, 1, 0
          %v1010 = vcvt.s32.f32 %v1009
          %s1011 = scalar_lea.vmem [#allocation3], %s988
          %1012 = vst.msk [vmem:[%s1011] sm:$0xff] %vm535, %v1010
        $region61: #{tpu_custom_call.1} parent=55 // loop_footer
          %s981 = sadd.s32 1, %s977
        $region62: #{tpu_custom_call.1} parent=55 // loop_footer_branch
          %976 = sbr.rel target = $region58
        $region63: #{tpu_custom_call.1} parent=55 // loop_exit
          _
        %v1013 = vld [vmem:[#allocation3] sm:$0xff]
        %v1014 = vld [vmem:[#allocation3 + $0x8] sm:$0xff]
        %v1015 = vld [vmem:[#allocation3 + $0x10] sm:$0xff]
        %v1016 = vld [vmem:[#allocation3 + $0x18] sm:$0xff]
        %v1017 = vld [vmem:[#allocation3 + $0x20] sm:$0xff]
        %v1018 = vld [vmem:[#allocation3 + $0x28] sm:$0xff]
        %v1019 = vld [vmem:[#allocation3 + $0x30] sm:$0xff]
        %v1020 = vld [vmem:[#allocation3 + $0x38] sm:$0xff]
        %v1021 = vld [vmem:[#allocation3 + $0x40] sm:$0xff]
        %v1022 = vld [vmem:[#allocation3 + $0x48] sm:$0xff]
        %v1023 = vld [vmem:[#allocation3 + $0x50] sm:$0xff]
        %v1024 = vld [vmem:[#allocation3 + $0x58] sm:$0xff]
        %v1025 = vld [vmem:[#allocation3 + $0x60] sm:$0xff]
        %v1026 = vld [vmem:[#allocation3 + $0x68] sm:$0xff]
        %v1027 = vld [vmem:[#allocation3 + $0x70] sm:$0xff]
        %v1028 = vld [vmem:[#allocation3 + $0x78] sm:$0xff]
        %v1029 = vpack.c.bf16 %v1014, %v1013
        %v1030 = vpack.c.bf16 %v1016, %v1015
        %v1031 = vpack.c.bf16 %v1018, %v1017
        %v1032 = vpack.c.bf16 %v1020, %v1019
        %v1033 = vpack.c.bf16 %v1022, %v1021
        %v1034 = vpack.c.bf16 %v1024, %v1023
        %v1035 = vpack.c.bf16 %v1026, %v1025
        %v1036 = vpack.c.bf16 %v1028, %v1027
        %v1037 = vld [vmem:[%s5] sm:$0xf]
        %v1038 = vld [vmem:[%s5 + $0x4] sm:$0xf]
        %v1039 = vld [vmem:[%s6] sm:$0x1]
        %v1041 = vlaneseq
        %v1042 = vshrl.u32 %v1041, 7
        %v1043 = vsub.s32 0, %v1042
        %v1044 = vrot.slane %v1039, %v1043
        %v1048 = vunpack.c.l.b16 %v1037
        %v1049 = vunpack.c.l.b16 %v1038
        %v1050 = vpack.c.b16 %v1049, %v1048
        %v1053 = vsel %vm535, %v1029, 0
        %v1056 = vsel %vm535, %v1030, 0
        %v1059 = vsel %vm535, %v1031, 0
        %v1062 = vsel %vm535, %v1032, 0
        %v1065 = vsel %vm535, %v1033, 0
        %v1068 = vsel %vm535, %v1034, 0
        %v1071 = vsel %vm535, %v1035, 0
        %v1074 = vsel %vm535, %v1036, 0
        %1076 = vmatprep.subr.bf16.mxu0 0
        %1077 = vmatpush1.bf16.msra.mxu0 0
        %1078 = vmatprep.subr.bf16.mxu0 0
        %1079 = vmatpush1.bf16.msra.mxu0 0
        %1080 = vmatprep.subr.bf16.mxu0 0
        %1081 = vmatpush1.bf16.msra.mxu0 0
        %1082 = vmatprep.subr.bf16.mxu0 0
        %1083 = vmatpush1.bf16.msra.mxu0 0
        %1084 = vmatprep.subr.bf16.mxu0 0
        %1085 = vmatpush1.bf16.msra.mxu0 0
        %1086 = vmatprep.subr.bf16.mxu0 0
        %1087 = vmatpush1.bf16.msra.mxu0 0
        %1088 = vmatprep.subr.bf16.mxu0 0
        %1089 = vmatpush1.bf16.msra.mxu0 0
        %1090 = vmatprep.subr.bf16.mxu0 0
        %1091 = vmatpush1.bf16.msra.mxu0 %v1050
        %1092 = vmatprep.subr.bf16.mxu0 0
        %1093 = vmatpush2.bf16.msra.mxu0 0
        %1094 = vmatprep.subr.bf16.mxu0 0
        %1095 = vmatpush2.bf16.msra.mxu0 0
        %1096 = vmatprep.subr.bf16.mxu0 0
        %1097 = vmatpush2.bf16.msra.mxu0 0
        %1098 = vmatprep.subr.bf16.mxu0 0
        %1099 = vmatpush2.bf16.msra.mxu0 0
        %1100 = vmatprep.subr.bf16.mxu0 0
        %1101 = vmatpush2.bf16.msra.mxu0 0
        %1102 = vmatprep.subr.bf16.mxu0 0
        %1103 = vmatpush2.bf16.msra.mxu0 0
        %1104 = vmatprep.subr.bf16.mxu0 0
        %1105 = vmatpush2.bf16.msra.mxu0 0
        %1106 = vmatprep.subr.bf16.mxu0 0
        %1107 = vmatpush2.bf16.msra.mxu0 0
        %1108 = vmatprep.mubr.bf16.mxu0 0
        %1109 = vmatmul.mubr.bf16.gmra.mxu0 %v1053
        %v1110 = vpop.f32.mrf.mxu0
        %v1111 = vadd.f32 %v1044, %v1110
        %v1112 = vpop.f32.mrf.mxu0
        %v1113 = vpop.f32.mrf.mxu0
        %v1114 = vadd.f32 %v1044, %v1113
        %v1115 = vpop.f32.mrf.mxu0
        %1116 = vmatprep.mubr.bf16.mxu0 0
        %1117 = vmatmul.mubr.bf16.gmra.mxu0 %v1056
        %v1118 = vpop.f32.mrf.mxu0
        %v1119 = vadd.f32 %v1044, %v1118
        %v1120 = vpop.f32.mrf.mxu0
        %v1121 = vpop.f32.mrf.mxu0
        %v1122 = vadd.f32 %v1044, %v1121
        %v1123 = vpop.f32.mrf.mxu0
        %1124 = vmatprep.mubr.bf16.mxu0 0
        %1125 = vmatmul.mubr.bf16.gmra.mxu0 %v1059
        %v1126 = vpop.f32.mrf.mxu0
        %v1127 = vadd.f32 %v1044, %v1126
        %v1128 = vpop.f32.mrf.mxu0
        %v1129 = vpop.f32.mrf.mxu0
        %v1130 = vadd.f32 %v1044, %v1129
        %v1131 = vpop.f32.mrf.mxu0
        %1132 = vmatprep.mubr.bf16.mxu0 0
        %1133 = vmatmul.mubr.bf16.gmra.mxu0 %v1062
        %v1134 = vpop.f32.mrf.mxu0
        %v1135 = vadd.f32 %v1044, %v1134
        %v1136 = vpop.f32.mrf.mxu0
        %v1137 = vpop.f32.mrf.mxu0
        %v1138 = vadd.f32 %v1044, %v1137
        %v1139 = vpop.f32.mrf.mxu0
        %1140 = vmatprep.mubr.bf16.mxu0 0
        %1141 = vmatmul.mubr.bf16.gmra.mxu0 %v1065
        %v1142 = vpop.f32.mrf.mxu0
        %v1143 = vadd.f32 %v1044, %v1142
        %v1144 = vpop.f32.mrf.mxu0
        %v1145 = vpop.f32.mrf.mxu0
        %v1146 = vadd.f32 %v1044, %v1145
        %v1147 = vpop.f32.mrf.mxu0
        %1148 = vmatprep.mubr.bf16.mxu0 0
        %1149 = vmatmul.mubr.bf16.gmra.mxu0 %v1068
        %v1150 = vpop.f32.mrf.mxu0
        %v1151 = vadd.f32 %v1044, %v1150
        %v1152 = vpop.f32.mrf.mxu0
        %v1153 = vpop.f32.mrf.mxu0
        %v1154 = vadd.f32 %v1044, %v1153
        %v1155 = vpop.f32.mrf.mxu0
        %1156 = vmatprep.mubr.bf16.mxu0 0
        %1157 = vmatmul.mubr.bf16.gmra.mxu0 %v1071
        %v1158 = vpop.f32.mrf.mxu0
        %v1159 = vadd.f32 %v1044, %v1158
        %v1160 = vpop.f32.mrf.mxu0
        %v1161 = vpop.f32.mrf.mxu0
        %v1162 = vadd.f32 %v1044, %v1161
        %v1163 = vpop.f32.mrf.mxu0
        %1164 = vmatprep.mubr.bf16.mxu0 0
        %1165 = vmatmul.mubr.bf16.gmra.mxu0 %v1074
        %v1166 = vpop.f32.mrf.mxu0
        %v1167 = vadd.f32 %v1044, %v1166
        %v1168 = vpop.f32.mrf.mxu0
        %v1169 = vpop.f32.mrf.mxu0
        %v1170 = vadd.f32 %v1044, %v1169
        %v1171 = vpop.f32.mrf.mxu0
        %1172 = vdwg.mxu0
        %v1173 = vmul.f32 %v973, 0.0
        %v1174 = vadd.f32 %v1173, %v1111
        %v1175 = vmul.f32 %v1174, %v973
        %v1176 = vadd.f32 %v1175, %v1114
        %v1177 = vmul.f32 %v1176, %v973
        %v1178 = vadd.f32 %v1177, %v1119
        %v1179 = vmul.f32 %v1178, %v973
        %v1180 = vadd.f32 %v1179, %v1122
        %v1181 = vmul.f32 %v1180, %v973
        %v1182 = vadd.f32 %v1181, %v1127
        %v1183 = vmul.f32 %v1182, %v973
        %v1184 = vadd.f32 %v1183, %v1130
        %v1185 = vmul.f32 %v1184, %v973
        %v1186 = vadd.f32 %v1185, %v1135
        %v1187 = vmul.f32 %v1186, %v973
        %v1188 = vadd.f32 %v1187, %v1138
        %v1189 = vmul.f32 %v1188, %v973
        %v1190 = vadd.f32 %v1189, %v1143
        %v1191 = vmul.f32 %v1190, %v973
        %v1192 = vadd.f32 %v1191, %v1146
        %v1193 = vmul.f32 %v1192, %v973
        %v1194 = vadd.f32 %v1193, %v1151
        %v1195 = vmul.f32 %v1194, %v973
        %v1196 = vadd.f32 %v1195, %v1154
        %v1197 = vmul.f32 %v1196, %v973
        %v1198 = vadd.f32 %v1197, %v1159
        %v1199 = vmul.f32 %v1198, %v973
        %v1200 = vadd.f32 %v1199, %v1162
        %v1201 = vmul.f32 %v1200, %v973
        %v1202 = vadd.f32 %v1201, %v1167
        %v1203 = vmul.f32 %v1202, %v973
        %v1204 = vadd.f32 %v1203, %v1170
        %vm1205 = vcmask 15360
        %1206 = vst.msk [vmem:[%s334] sm:$0xff] %vm1205, %v1174
        %1207 = vst.msk [vmem:[%s334 + $0x8] sm:$0xff] %vm1205, %v1176
        %1208 = vst.msk [vmem:[%s334 + $0x10] sm:$0xff] %vm1205, %v1178
        %1209 = vst.msk [vmem:[%s334 + $0x18] sm:$0xff] %vm1205, %v1180
        %1210 = vst.msk [vmem:[%s334 + $0x20] sm:$0xff] %vm1205, %v1182
        %1211 = vst.msk [vmem:[%s334 + $0x28] sm:$0xff] %vm1205, %v1184
        %1212 = vst.msk [vmem:[%s334 + $0x30] sm:$0xff] %vm1205, %v1186
        %1213 = vst.msk [vmem:[%s334 + $0x38] sm:$0xff] %vm1205, %v1188
        %1214 = vst.msk [vmem:[%s334 + $0x40] sm:$0xff] %vm1205, %v1190
        %1215 = vst.msk [vmem:[%s334 + $0x48] sm:$0xff] %vm1205, %v1192
        %1216 = vst.msk [vmem:[%s334 + $0x50] sm:$0xff] %vm1205, %v1194
        %1217 = vst.msk [vmem:[%s334 + $0x58] sm:$0xff] %vm1205, %v1196
        %1218 = vst.msk [vmem:[%s334 + $0x60] sm:$0xff] %vm1205, %v1198
        %1219 = vst.msk [vmem:[%s334 + $0x68] sm:$0xff] %vm1205, %v1200
        %1220 = vst.msk [vmem:[%s334 + $0x70] sm:$0xff] %vm1205, %v1202
        %1221 = vst.msk [vmem:[%s334 + $0x78] sm:$0xff] %vm1205, %v1204
        %s1222 = sand.u32 %s227, 1
        %s1223 = sand.u32 %s227, 1
        %s1224 = smul.addr %s1223, 128
        %s1225 = scalar_lea.vmem [#allocation4], %s1224
        // Predicated region
        $region64: #{tpu_custom_call.1} parent=55 // pred_check
          %p1226 = pneg %p237
        $region65: #{tpu_custom_call.1} parent=55 // pred_check_branch
          %1228 = sbr.rel (%p1226) target = $region67
        $region66: #{tpu_custom_call.1} parent=55 // pred_region
          %s1229 = smul.addr %s20, 8
          %s1230 = scalar_lea.vmem %s9, %s1229
          // Predicated region
          $region68: #{tpu_custom_call.1} parent=66 // pred_check
            _
          $region69: #{tpu_custom_call.1} parent=66 // pred_check_branch
            %1232 = sbr.rel (0) target = $region71
          $region70: #{tpu_custom_call.1} parent=66 // pred_region
            // Predicated region
            $region72: #{tpu_custom_call.1} parent=70 // pred_check
              _
            $region73: #{tpu_custom_call.1} parent=70 // pred_check_branch
              %1234 = sbr.rel (0) target = $region75
            $region74: #{tpu_custom_call.1} parent=70 // pred_region
              // Predicated region
              $region87: #{tpu_custom_call.1} parent=74 // pred_check
                _
              $region88: #{tpu_custom_call.1} parent=74 // pred_check_branch
                %1280 = sbr.rel (0) target = $region90
              $region89: #{tpu_custom_call.1} parent=74 // pred_region
                loop: start=0, step=1, limit=1
                $region91: #{tpu_custom_call.1} parent=89 // loop_pre_header
                  _
                $region92: #{tpu_custom_call.1} parent=89 // loop_header
                  %s1282 = sphi 0, %s1286
                  %p1283 = scmp.ge.s32.totalorder %s1282, 1
                  %s1287 = sphi %s1225, %s1225
                  %s1288 = sphi %s1230, %s1230
                $region93: #{tpu_custom_call.1} parent=89 // loop_header_branch
                  %1285 = sbr.rel (%p1283) target = $region97
                $region94: #{tpu_custom_call.1} parent=89 // loop_body
                  %v1289 = vld [vmem:[%s1287] sm:$0xff]
                  %1290 = vst [vmem:[%s1288] sm:$0xff] %v1289
                  %v1291 = vld [vmem:[%s1287 + $0x8] sm:$0xff]
                  %1292 = vst [vmem:[%s1288 + $0x10] sm:$0xff] %v1291
                  %v1293 = vld [vmem:[%s1287 + $0x10] sm:$0xff]
                  %1294 = vst [vmem:[%s1288 + $0x20] sm:$0xff] %v1293
                  %v1295 = vld [vmem:[%s1287 + $0x18] sm:$0xff]
                  %1296 = vst [vmem:[%s1288 + $0x30] sm:$0xff] %v1295
                  %v1297 = vld [vmem:[%s1287 + $0x20] sm:$0xff]
                  %1298 = vst [vmem:[%s1288 + $0x40] sm:$0xff] %v1297
                  %v1299 = vld [vmem:[%s1287 + $0x28] sm:$0xff]
                  %1300 = vst [vmem:[%s1288 + $0x50] sm:$0xff] %v1299
                  %v1301 = vld [vmem:[%s1287 + $0x30] sm:$0xff]
                  %1302 = vst [vmem:[%s1288 + $0x60] sm:$0xff] %v1301
                  %v1303 = vld [vmem:[%s1287 + $0x38] sm:$0xff]
                  %1304 = vst [vmem:[%s1288 + $0x70] sm:$0xff] %v1303
                  %v1305 = vld [vmem:[%s1287 + $0x40] sm:$0xff]
                  %1306 = vst [vmem:[%s1288 + $0x80] sm:$0xff] %v1305
                  %v1307 = vld [vmem:[%s1287 + $0x48] sm:$0xff]
                  %1308 = vst [vmem:[%s1288 + $0x90] sm:$0xff] %v1307
                  %v1309 = vld [vmem:[%s1287 + $0x50] sm:$0xff]
                  %1310 = vst [vmem:[%s1288 + $0xa0] sm:$0xff] %v1309
                  %v1311 = vld [vmem:[%s1287 + $0x58] sm:$0xff]
                  %1312 = vst [vmem:[%s1288 + $0xb0] sm:$0xff] %v1311
                  %v1313 = vld [vmem:[%s1287 + $0x60] sm:$0xff]
                  %1314 = vst [vmem:[%s1288 + $0xc0] sm:$0xff] %v1313
                  %v1315 = vld [vmem:[%s1287 + $0x68] sm:$0xff]
                  %1316 = vst [vmem:[%s1288 + $0xd0] sm:$0xff] %v1315
                  %v1317 = vld [vmem:[%s1287 + $0x70] sm:$0xff]
                  %1318 = vst [vmem:[%s1288 + $0xe0] sm:$0xff] %v1317
                  %v1319 = vld [vmem:[%s1287 + $0x78] sm:$0xff]
                  %1320 = vst [vmem:[%s1288 + $0xf0] sm:$0xff] %v1319
                $region95: #{tpu_custom_call.1} parent=89 // loop_footer
                  %s1286 = sadd.s32 1, %s1282
                $region96: #{tpu_custom_call.1} parent=89 // loop_footer_branch
                  %1281 = sbr.rel target = $region92
                $region97: #{tpu_custom_call.1} parent=89 // loop_exit
                  _
              $region90: #{tpu_custom_call.1} parent=74 // pred_fallthru
                _
              // Predicated region
              $region98: #{tpu_custom_call.1} parent=74 // pred_check
                _
              $region99: #{tpu_custom_call.1} parent=74 // pred_check_branch
                %1322 = sbr.rel target = $region101
              $region100: #{tpu_custom_call.1} parent=74 // pred_region
                _
              $region101: #{tpu_custom_call.1} parent=74 // pred_fallthru
                _
            $region75: #{tpu_custom_call.1} parent=70 // pred_fallthru
              _
            // Predicated region
            $region76: #{tpu_custom_call.1} parent=70 // pred_check
              _
            $region77: #{tpu_custom_call.1} parent=70 // pred_check_branch
              %1236 = sbr.rel target = $region79
            $region78: #{tpu_custom_call.1} parent=70 // pred_region
              %s1238 = ssub.s32 256, 1
              loop: start=0, step=1, limit=1
              $region80: #{tpu_custom_call.1} parent=78 // loop_pre_header
                _
              $region81: #{tpu_custom_call.1} parent=78 // loop_header
                %s1240 = sphi 0, %s1244
                %p1241 = scmp.ge.s32.totalorder %s1240, 1
                %s1245 = sphi %s1225, %s1225
                %s1246 = sphi %s1230, %s1230
              $region82: #{tpu_custom_call.1} parent=78 // loop_header_branch
                %1243 = sbr.rel (%p1241) target = $region86
              $region83: #{tpu_custom_call.1} parent=78 // loop_body
                %v1247 = vld [vmem:[%s1245] sm:%s1238]
                %1248 = vst [vmem:[%s1246] sm:%s1238] %v1247
                %v1249 = vld [vmem:[%s1245 + $0x8] sm:%s1238]
                %1250 = vst [vmem:[%s1246 + $0x10] sm:%s1238] %v1249
                %v1251 = vld [vmem:[%s1245 + $0x10] sm:%s1238]
                %1252 = vst [vmem:[%s1246 + $0x20] sm:%s1238] %v1251
                %v1253 = vld [vmem:[%s1245 + $0x18] sm:%s1238]
                %1254 = vst [vmem:[%s1246 + $0x30] sm:%s1238] %v1253
                %v1255 = vld [vmem:[%s1245 + $0x20] sm:%s1238]
                %1256 = vst [vmem:[%s1246 + $0x40] sm:%s1238] %v1255
                %v1257 = vld [vmem:[%s1245 + $0x28] sm:%s1238]
                %1258 = vst [vmem:[%s1246 + $0x50] sm:%s1238] %v1257
                %v1259 = vld [vmem:[%s1245 + $0x30] sm:%s1238]
                %1260 = vst [vmem:[%s1246 + $0x60] sm:%s1238] %v1259
                %v1261 = vld [vmem:[%s1245 + $0x38] sm:%s1238]
                %1262 = vst [vmem:[%s1246 + $0x70] sm:%s1238] %v1261
                %v1263 = vld [vmem:[%s1245 + $0x40] sm:%s1238]
                %1264 = vst [vmem:[%s1246 + $0x80] sm:%s1238] %v1263
                %v1265 = vld [vmem:[%s1245 + $0x48] sm:%s1238]
                %1266 = vst [vmem:[%s1246 + $0x90] sm:%s1238] %v1265
                %v1267 = vld [vmem:[%s1245 + $0x50] sm:%s1238]
                %1268 = vst [vmem:[%s1246 + $0xa0] sm:%s1238] %v1267
                %v1269 = vld [vmem:[%s1245 + $0x58] sm:%s1238]
                %1270 = vst [vmem:[%s1246 + $0xb0] sm:%s1238] %v1269
                %v1271 = vld [vmem:[%s1245 + $0x60] sm:%s1238]
                %1272 = vst [vmem:[%s1246 + $0xc0] sm:%s1238] %v1271
                %v1273 = vld [vmem:[%s1245 + $0x68] sm:%s1238]
                %1274 = vst [vmem:[%s1246 + $0xd0] sm:%s1238] %v1273
                %v1275 = vld [vmem:[%s1245 + $0x70] sm:%s1238]
                %1276 = vst [vmem:[%s1246 + $0xe0] sm:%s1238] %v1275
                %v1277 = vld [vmem:[%s1245 + $0x78] sm:%s1238]
                %1278 = vst [vmem:[%s1246 + $0xf0] sm:%s1238] %v1277
              $region84: #{tpu_custom_call.1} parent=78 // loop_footer
                %s1244 = sadd.s32 1, %s1240
              $region85: #{tpu_custom_call.1} parent=78 // loop_footer_branch
                %1239 = sbr.rel target = $region81
              $region86: #{tpu_custom_call.1} parent=78 // loop_exit
                _
            $region79: #{tpu_custom_call.1} parent=70 // pred_fallthru
              _
          $region71: #{tpu_custom_call.1} parent=66 // pred_fallthru
            _
          %1323 = vnop
        $region67: #{tpu_custom_call.1} parent=55 // pred_fallthru
          _
      $region56: #{tpu_custom_call.1} parent=5 // pred_fallthru
        _
      %p1324 = scmp.le.s32.totalorder 2, %s15
      // Predicated region
      $region102: #{tpu_custom_call.1} parent=5 // pred_check
        %p1325 = pneg %p1324
      $region103: #{tpu_custom_call.1} parent=5 // pred_check_branch
        %1327 = sbr.rel (%p1325) target = $region105
      $region104: #{tpu_custom_call.1} parent=5 // pred_region
        %s1328 = ssub.s32 %s15, 2
        // Predicated region
        $region106: #{tpu_custom_call.1} parent=104 // pred_check
          %p1329 = pneg %p243
        $region107: #{tpu_custom_call.1} parent=104 // pred_check_branch
          %1331 = sbr.rel (%p1329) target = $region109
        $region108: #{tpu_custom_call.1} parent=104 // pred_region
          %s1332 = sand.u32 %s228, 1
          %s1333 = sand.u32 %s228, 1
          %s1334 = smul.addr %s1333, 128
          %s1335 = scalar_lea.vmem [#allocation4], %s1334
        $region109: #{tpu_custom_call.1} parent=104 // pred_fallthru
          _
      $region105: #{tpu_custom_call.1} parent=5 // pred_fallthru
        _
    $region6: #{tpu_custom_call.1} parent=1 // loop_footer
      %s19 = sadd.s32 1, %s15
    $region7: #{tpu_custom_call.1} parent=1 // loop_footer_branch
      %14 = sbr.rel target = $region3
    $region8: #{tpu_custom_call.1} parent=1 // loop_exit
      _

</llo_original>
